<compile_context>
chip_gen: v7x
topology: tpu7x:2x2x1
jax: 0.10.0
libtpu: 0.0.40
codegen_flags: <defaults>
</compile_context>

<pallas_src>
import functools

import jax
import jax.numpy as jnp
from jax import lax
from jax.experimental import pallas as pl
from jax.experimental.pallas import tpu as pltpu


# ---------------- config (mirrors `cfg` in the PyTorch code) ----------------
EMBED_DIM = 32
HEAD_NUM = 4
POS_NUM = 8          # sequence length
MULTI = 4
HEAD_DIM = EMBED_DIM // HEAD_NUM
LN_EPS = 1e-5


def _layer_norm(v, gamma, beta):
    # var = E[x^2] - mu^2 : the two lane-axis reductions are independent
    mu = jnp.mean(v, axis=-1, keepdims=True)
    var = jnp.maximum(jnp.mean(v * v, axis=-1, keepdims=True) - mu * mu, 0.0)
    return (v - mu) * lax.rsqrt(var + LN_EPS) * gamma + beta


def _block_kernel(
    x_ref,
    mask_ref,
    ln1_g_ref, ln1_b_ref,
    wqkv_ref, bqkv_ref,
    wp_ref, bp_ref,
    ln2_g_ref, ln2_b_ref,
    w1_ref, b1_ref, w2_ref, b2_ref,
    o_ref,
    *, seq_len: int, head_num: int, head_dim: int,
):
    N, E = x_ref.shape            # N = (#batches in this grid step) * seq_len
    S = seq_len
    nb = N // S                   # batches handled by this grid step

    x = x_ref[...]                                   # (N, E) fp32

    # ---- LayerNorm 1 ----
    hn = _layer_norm(x, ln1_g_ref[...], ln1_b_ref[...])

    # ---- fused QKV projection: ONE (N,E)@(E,3E) matmul ----
    # columns of wqkv_ref are [Q heads | K heads | V heads]; 1/sqrt(dh) already
    # folded into the Q columns on the host.
    qkv = jnp.dot(hn, wqkv_ref[...], preferred_element_type=jnp.float32) + bqkv_ref[...]

    mask_add = mask_ref[...]                         # (S, S) additive: 0 / -1e5

    # ---- multi-head attention (attn_drop / resi_drop identity in eval mode) ----
    heads = []
    for h in range(head_num):                        # static 4-way unroll
        lo = h * head_dim
        q = qkv[:, lo:lo + head_dim].reshape(nb, S, head_dim)
        k = qkv[:, E + lo:E + lo + head_dim].reshape(nb, S, head_dim)
        v = qkv[:, 2 * E + lo:2 * E + lo + head_dim].reshape(nb, S, head_dim)

        w = jnp.einsum("bsd,btd->bst", q, k,
                       preferred_element_type=jnp.float32)
        w = w + mask_add                             # broadcast over batch

        # explicit softmax (keep row-max subtraction for numerical safety)
        m = jnp.max(w, axis=-1, keepdims=True)
        e = jnp.exp(w - m)
        denom = jnp.sum(e, axis=-1, keepdims=True)
        p = e * pl.reciprocal(denom, approx=False)

        a = jnp.einsum("bst,btd->bsd", p, v,
                       preferred_element_type=jnp.float32)
        heads.append(a.reshape(N, head_dim))

    # assemble heads along lanes (static 8-lane pieces) -> ONE output-proj matmul
    a_all = jnp.concatenate(heads, axis=-1)          # (N, E)
    attn = jnp.dot(a_all, wp_ref[...], preferred_element_type=jnp.float32) + bp_ref[...]
    a_res = attn + x                                 # residual 1

    # ---- LayerNorm 2 ----
    a_ln = _layer_norm(a_res, ln2_g_ref[...], ln2_b_ref[...])

    # ---- MLP: Linear -> LeakyReLU(0.01) -> Linear ----
    ff = jnp.dot(a_ln, w1_ref[...], preferred_element_type=jnp.float32) + b1_ref[...]
    ff = jnp.where(ff >= 0.0, ff, 0.01 * ff)
    ff = jnp.dot(ff, w2_ref[...], preferred_element_type=jnp.float32) + b2_ref[...]

    # NOTE: residual 2 adds the post-LN value (matches the PyTorch Block: y = h + a
    # where `a` is the LayerNorm-2 output), not the pre-LN residual.
    o_ref[...] = ff + a_ln                           # residual 2


def prepare_block_params(params, *, is_mask=False, seq_len=POS_NUM):
    """One-time host-side weight relayout (hoisted out of the per-call path)."""
    E, H, dh = EMBED_DIM, HEAD_NUM, HEAD_DIM
    inv_dk = 1.0 / (float(dh) ** 0.5)

    # fused qkv weight (E, 3E): original column = h*3*dh + c*dh + d
    # -> relayout to chunk-major [Q heads | K heads | V heads]: c*E + h*dh + d
    w3 = params["wqkv"].reshape(E, H, 3, dh)                       # (E, h, c, d)
    wqkv_r = jnp.transpose(w3, (0, 2, 1, 3)).reshape(E, 3 * E)     # (E, 3E)
    b3 = params["bqkv"].reshape(1, H, 3, dh)
    bqkv_r = jnp.transpose(b3, (0, 2, 1, 3)).reshape(1, 3 * E)

    # fold 1/sqrt(dh) into the Q columns (weight AND bias)
    scale = jnp.concatenate(
        [jnp.full((3 * E,), 1.0, jnp.float32).at[:E].set(inv_dk)]).reshape(1, 3 * E)
    wqkv_r = wqkv_r * scale
    bqkv_r = bqkv_r * scale

    # precomputed additive causal mask (0 where allowed, -1e5 where masked)
    if is_mask:
        row = lax.broadcasted_iota(jnp.int32, (seq_len, seq_len), 0)
        col = lax.broadcasted_iota(jnp.int32, (seq_len, seq_len), 1)
        mask_add = jnp.where(row >= col, 0.0, -100000.0).astype(jnp.float32)
    else:
        mask_add = jnp.zeros((seq_len, seq_len), jnp.float32)

    return (
        mask_add,
        params["ln1_g"], params["ln1_b"],
        wqkv_r, bqkv_r,
        params["wproj"], params["bproj"],
        params["ln2_g"], params["ln2_b"],
        params["w1"], params["b1"],
        params["w2"], params["b2"],
    )


def block_forward(x, prepped, *, grid_b=1):
    """x: (B, S, E) float32. `prepped` = prepare_block_params(...). Returns (B, S, E).

    grid_b=1 collapses the grid (best on all generations at this size: the whole
    batch is one MXU slab, per-step overhead paid once).  Only raise grid_b once
    each TensorCore would get >=128 rows of B*S.
    """
    B, S, E = x.shape
    assert E == EMBED_DIM
    assert B % grid_b == 0
    nb = B // grid_b
    N = nb * S

    xf = x.reshape(B * S, E)                         # fold B*S into the matmul M dim

    in_specs = [pl.BlockSpec((N, E), lambda g: (g, 0))]
    in_specs += [
        pl.BlockSpec(a.shape, lambda g, _nd=a.ndim: (0,) * _nd)   # VMEM-resident weights
        for a in prepped
    ]

    kernel = functools.partial(
        _block_kernel, seq_len=S, head_num=HEAD_NUM, head_dim=HEAD_DIM)

    yf = pl.pallas_call(
        kernel,
        out_shape=jax.ShapeDtypeStruct((B * S, E), jnp.float32),
        grid=(grid_b,),
        in_specs=in_specs,
        out_specs=pl.BlockSpec((N, E), lambda g: (g, 0)),
        compiler_params=pltpu.CompilerParams(
            dimension_semantics=("parallel",)),
    )(xf, *prepped)

    return yf.reshape(B, S, E)


def init_params(key):
    ks = jax.random.split(key, 8)
    E, M = EMBED_DIM, MULTI * EMBED_DIM

    def lin(k, fan_in, fan_out):
        bound = 1.0 / (fan_in ** 0.5)
        kw, kb = jax.random.split(k)
        w = jax.random.uniform(kw, (fan_in, fan_out), jnp.float32, -bound, bound)
        b = jax.random.uniform(kb, (1, fan_out), jnp.float32, -bound, bound)
        return w, b

    wqkv, bqkv = lin(ks[0], E, 3 * E)
    wproj, bproj = lin(ks[1], E, E)
    w1, b1 = lin(ks[2], E, M)
    w2, b2 = lin(ks[3], M, E)
    return {
        "ln1_g": jnp.ones((1, E), jnp.float32),
        "ln1_b": jnp.zeros((1, E), jnp.float32),
        "wqkv": wqkv, "bqkv": bqkv,
        "wproj": wproj, "bproj": bproj,
        "ln2_g": jnp.ones((1, E), jnp.float32),
        "ln2_b": jnp.zeros((1, E), jnp.float32),
        "w1": w1, "b1": b1,
        "w2": w2, "b2": b2,
    }


def block_forward_ref(x, p, *, is_mask=False):
    """Pure-JAX reference mirroring the PyTorch forward (eval mode)."""
    def ln(v, g, b):
        mu = jnp.mean(v, -1, keepdims=True)
        var = jnp.mean((v - mu) ** 2, -1, keepdims=True)
        return (v - mu) / jnp.sqrt(var + LN_EPS) * g + b

    B, S, E = x.shape
    h = ln(x, p["ln1_g"], p["ln1_b"])
    qkv = h @ p["wqkv"] + p["bqkv"]                       # (B,S,3E)
    qkv = qkv.reshape(B, S, HEAD_NUM, 3 * HEAD_DIM).transpose(0, 2, 1, 3)
    q, k, v = jnp.split(qkv, 3, axis=-1)
    w = q @ jnp.swapaxes(k, -1, -2) / (HEAD_DIM ** 0.5)
    if is_mask:
        mask = jnp.tril(jnp.ones((S, S), jnp.float32))
        w = w * mask - (1.0 - mask) * 100000.0
    w = jax.nn.softmax(w, axis=-1)
    a = (w @ v).transpose(0, 2, 1, 3).reshape(B, S, E)
    attn = a @ p["wproj"] + p["bproj"]
    a_res = attn + x
    a2 = ln(a_res, p["ln2_g"], p["ln2_b"])
    ff = a2 @ p["w1"] + p["b1"]
    ff = jnp.where(ff >= 0, ff, 0.01 * ff)
    ff = ff @ p["w2"] + p["b2"]
    return ff + a2


if __name__ == "__main__":
    key = jax.random.PRNGKey(0)
    kx, kp = jax.random.split(key)
    B, S, E = 2, POS_NUM, EMBED_DIM
    x = jax.random.normal(kx, (B, S, E), jnp.float32)
    params = init_params(kp)

    prepped = prepare_block_params(params, is_mask=True, seq_len=S)  # once, at init
    out = block_forward(x, prepped, grid_b=1)
    out = jax.block_until_ready(out)

    ref = block_forward_ref(x, params, is_mask=True)
    assert out.shape == (B, S, E)
    assert jnp.allclose(out, ref, atol=1e-4, rtol=1e-4), "mismatch vs JAX reference"

    print("KERNEL_OK")
</pallas_src>

<mosaic_0001>
module attributes {stable_mosaic.version = 11 : i64} {
  func.func @_block_kernel(%arg0: i32, %arg1: memref<16x32xf32, #tpu.memory_space<vmem>>, %arg2: memref<8x8xf32, #tpu.memory_space<vmem>>, %arg3: memref<1x32xf32, #tpu.memory_space<vmem>>, %arg4: memref<1x32xf32, #tpu.memory_space<vmem>>, %arg5: memref<32x96xf32, #tpu.memory_space<vmem>>, %arg6: memref<1x96xf32, #tpu.memory_space<vmem>>, %arg7: memref<32x32xf32, #tpu.memory_space<vmem>>, %arg8: memref<1x32xf32, #tpu.memory_space<vmem>>, %arg9: memref<1x32xf32, #tpu.memory_space<vmem>>, %arg10: memref<1x32xf32, #tpu.memory_space<vmem>>, %arg11: memref<32x128xf32, #tpu.memory_space<vmem>>, %arg12: memref<1x128xf32, #tpu.memory_space<vmem>>, %arg13: memref<128x32xf32, #tpu.memory_space<vmem>>, %arg14: memref<1x32xf32, #tpu.memory_space<vmem>>, %arg15: memref<16x32xf32, #tpu.memory_space<vmem>>) attributes {dimension_semantics = [#tpu.dimension_semantics<parallel>], iteration_bounds = array<i64: 1>, scalar_prefetch = 0 : i64, scratch_operands = 0 : i64, tpu.core_type = #tpu.core_type<tc>, window_params = [{transform_indices = @transform_0, window_bounds = array<i64: 16, 32>}, {pipeline_mode = #tpu.pipeline_mode<synchronous>, transform_indices = @transform_1, window_bounds = array<i64: 8, 8>}, {pipeline_mode = #tpu.pipeline_mode<synchronous>, transform_indices = @transform_2, window_bounds = array<i64: 1, 32>}, {pipeline_mode = #tpu.pipeline_mode<synchronous>, transform_indices = @transform_3, window_bounds = array<i64: 1, 32>}, {pipeline_mode = #tpu.pipeline_mode<synchronous>, transform_indices = @transform_4, window_bounds = array<i64: 32, 96>}, {pipeline_mode = #tpu.pipeline_mode<synchronous>, transform_indices = @transform_5, window_bounds = array<i64: 1, 96>}, {pipeline_mode = #tpu.pipeline_mode<synchronous>, transform_indices = @transform_6, window_bounds = array<i64: 32, 32>}, {pipeline_mode = #tpu.pipeline_mode<synchronous>, transform_indices = @transform_7, window_bounds = array<i64: 1, 32>}, {pipeline_mode = #tpu.pipeline_mode<synchronous>, transform_indices = @transform_8, window_bounds = array<i64: 1, 32>}, {pipeline_mode = #tpu.pipeline_mode<synchronous>, transform_indices = @transform_9, window_bounds = array<i64: 1, 32>}, {pipeline_mode = #tpu.pipeline_mode<synchronous>, transform_indices = @transform_10, window_bounds = array<i64: 32, 128>}, {pipeline_mode = #tpu.pipeline_mode<synchronous>, transform_indices = @transform_11, window_bounds = array<i64: 1, 128>}, {pipeline_mode = #tpu.pipeline_mode<synchronous>, transform_indices = @transform_12, window_bounds = array<i64: 128, 32>}, {pipeline_mode = #tpu.pipeline_mode<synchronous>, transform_indices = @transform_13, window_bounds = array<i64: 1, 32>}, {transform_indices = @transform_14, window_bounds = array<i64: 16, 32>}]} {
    %c0 = arith.constant 0 : index
    %c0_0 = arith.constant 0 : index
    %0 = vector.load %arg1[%c0, %c0_0] : memref<16x32xf32, #tpu.memory_space<vmem>>, vector<16x32xf32>
    %c0_1 = arith.constant 0 : index
    %c0_2 = arith.constant 0 : index
    %1 = vector.load %arg3[%c0_1, %c0_2] : memref<1x32xf32, #tpu.memory_space<vmem>>, vector<1x32xf32>
    %c0_3 = arith.constant 0 : index
    %c0_4 = arith.constant 0 : index
    %2 = vector.load %arg4[%c0_3, %c0_4] : memref<1x32xf32, #tpu.memory_space<vmem>>, vector<1x32xf32>
    %cst = arith.constant dense<0.000000e+00> : vector<16xf32>
    %3 = vector.multi_reduction <add>, %0, %cst [1] : vector<16x32xf32> to vector<16xf32>
    %4 = vector.shape_cast %3 : vector<16xf32> to vector<16x1xf32>
    %cst_5 = arith.constant 3.200000e+01 : f32
    %5 = vector.broadcast %cst_5 : f32 to vector<16x1xf32>
    %6 = arith.divf %4, %5 : vector<16x1xf32>
    %7 = arith.mulf %0, %0 : vector<16x32xf32>
    %cst_6 = arith.constant dense<0.000000e+00> : vector<16xf32>
    %8 = vector.multi_reduction <add>, %7, %cst_6 [1] : vector<16x32xf32> to vector<16xf32>
    %9 = vector.shape_cast %8 : vector<16xf32> to vector<16x1xf32>
    %cst_7 = arith.constant 3.200000e+01 : f32
    %10 = vector.broadcast %cst_7 : f32 to vector<16x1xf32>
    %11 = arith.divf %9, %10 : vector<16x1xf32>
    %12 = arith.mulf %6, %6 : vector<16x1xf32>
    %13 = arith.subf %11, %12 : vector<16x1xf32>
    %cst_8 = arith.constant 0.000000e+00 : f32
    %14 = vector.broadcast %cst_8 : f32 to vector<16x1xf32>
    %15 = arith.maximumf %13, %14 : vector<16x1xf32>
    %16 = vector.broadcast %6 : vector<16x1xf32> to vector<16x32xf32>
    %17 = arith.subf %0, %16 : vector<16x32xf32>
    %cst_9 = arith.constant 9.99999974E-6 : f32
    %18 = vector.broadcast %cst_9 : f32 to vector<16x1xf32>
    %19 = arith.addf %15, %18 : vector<16x1xf32>
    %20 = math.rsqrt %19 : vector<16x1xf32>
    %21 = vector.broadcast %20 : vector<16x1xf32> to vector<16x32xf32>
    %22 = arith.mulf %17, %21 : vector<16x32xf32>
    %23 = vector.broadcast %1 : vector<1x32xf32> to vector<16x32xf32>
    %24 = arith.mulf %22, %23 : vector<16x32xf32>
    %25 = vector.broadcast %2 : vector<1x32xf32> to vector<16x32xf32>
    %26 = arith.addf %24, %25 : vector<16x32xf32>
    %c0_10 = arith.constant 0 : index
    %c0_11 = arith.constant 0 : index
    %27 = vector.load %arg5[%c0_10, %c0_11] : memref<32x96xf32, #tpu.memory_space<vmem>>, vector<32x96xf32>
    %cst_12 = arith.constant dense<0.000000e+00> : vector<16x96xf32>
    %28 = tpu.matmul %26, %27, %cst_12 {dimension_numbers = #tpu.dot_dimension_numbers<[1], [0], [0], [1], [0, 0, 1, 1], [], []>} : vector<16x32xf32>, vector<32x96xf32>, vector<16x96xf32> -> vector<16x96xf32>
    %c0_13 = arith.constant 0 : index
    %c0_14 = arith.constant 0 : index
    %29 = vector.load %arg6[%c0_13, %c0_14] : memref<1x96xf32, #tpu.memory_space<vmem>>, vector<1x96xf32>
    %30 = vector.broadcast %29 : vector<1x96xf32> to vector<16x96xf32>
    %31 = arith.addf %28, %30 : vector<16x96xf32>
    %c0_15 = arith.constant 0 : index
    %c0_16 = arith.constant 0 : index
    %32 = vector.load %arg2[%c0_15, %c0_16] : memref<8x8xf32, #tpu.memory_space<vmem>>, vector<8x8xf32>
    %33 = vector.extract_strided_slice %31 {offsets = [0, 0], sizes = [16, 8], strides = [1, 1]} : vector<16x96xf32> to vector<16x8xf32>
    %34 = vector.shape_cast %33 : vector<16x8xf32> to vector<2x8x8xf32>
    %35 = vector.extract_strided_slice %31 {offsets = [0, 32], sizes = [16, 8], strides = [1, 1]} : vector<16x96xf32> to vector<16x8xf32>
    %36 = vector.shape_cast %35 : vector<16x8xf32> to vector<2x8x8xf32>
    %37 = vector.extract_strided_slice %31 {offsets = [0, 64], sizes = [16, 8], strides = [1, 1]} : vector<16x96xf32> to vector<16x8xf32>
    %38 = vector.shape_cast %37 : vector<16x8xf32> to vector<2x8x8xf32>
    "tpu.trace_start"() <{level = 10 : i32, message = "bsd,btd->bst"}> : () -> ()
    %cst_17 = arith.constant dense<0.000000e+00> : vector<2x8x8xf32>
    %39 = tpu.matmul %34, %36, %cst_17 {dimension_numbers = #tpu.dot_dimension_numbers<[2], [2], [1], [1], [0, 0, 0, 1, 1, 1], [0], [0]>} : vector<2x8x8xf32>, vector<2x8x8xf32>, vector<2x8x8xf32> -> vector<2x8x8xf32>
    "tpu.trace_stop"() : () -> ()
    %40 = vector.shape_cast %32 : vector<8x8xf32> to vector<1x8x8xf32>
    %41 = vector.broadcast %40 : vector<1x8x8xf32> to vector<2x8x8xf32>
    %42 = arith.addf %39, %41 : vector<2x8x8xf32>
    %cst_18 = arith.constant dense<0xFF800000> : vector<2x8xf32>
    %43 = vector.multi_reduction <maximumf>, %42, %cst_18 [2] : vector<2x8x8xf32> to vector<2x8xf32>
    %44 = vector.shape_cast %43 : vector<2x8xf32> to vector<2x8x1xf32>
    %45 = vector.broadcast %44 : vector<2x8x1xf32> to vector<2x8x8xf32>
    %46 = arith.subf %42, %45 : vector<2x8x8xf32>
    %47 = math.exp %46 : vector<2x8x8xf32>
    %cst_19 = arith.constant dense<0.000000e+00> : vector<2x8xf32>
    %48 = vector.multi_reduction <add>, %47, %cst_19 [2] : vector<2x8x8xf32> to vector<2x8xf32>
    %49 = vector.shape_cast %48 : vector<2x8xf32> to vector<2x8x1xf32>
    %50 = tpu.reciprocal %49 : vector<2x8x1xf32> -> vector<2x8x1xf32>
    %51 = vector.broadcast %50 : vector<2x8x1xf32> to vector<2x8x8xf32>
    %52 = arith.mulf %47, %51 : vector<2x8x8xf32>
    "tpu.trace_start"() <{level = 10 : i32, message = "bst,btd->bsd"}> : () -> ()
    %cst_20 = arith.constant dense<0.000000e+00> : vector<2x8x8xf32>
    %53 = tpu.matmul %52, %38, %cst_20 {dimension_numbers = #tpu.dot_dimension_numbers<[2], [1], [1], [2], [0, 0, 0, 1, 1, 2], [0], [0]>} : vector<2x8x8xf32>, vector<2x8x8xf32>, vector<2x8x8xf32> -> vector<2x8x8xf32>
    "tpu.trace_stop"() : () -> ()
    %54 = vector.shape_cast %53 : vector<2x8x8xf32> to vector<16x8xf32>
    %55 = vector.extract_strided_slice %31 {offsets = [0, 8], sizes = [16, 8], strides = [1, 1]} : vector<16x96xf32> to vector<16x8xf32>
    %56 = vector.shape_cast %55 : vector<16x8xf32> to vector<2x8x8xf32>
    %57 = vector.extract_strided_slice %31 {offsets = [0, 40], sizes = [16, 8], strides = [1, 1]} : vector<16x96xf32> to vector<16x8xf32>
    %58 = vector.shape_cast %57 : vector<16x8xf32> to vector<2x8x8xf32>
    %59 = vector.extract_strided_slice %31 {offsets = [0, 72], sizes = [16, 8], strides = [1, 1]} : vector<16x96xf32> to vector<16x8xf32>
    %60 = vector.shape_cast %59 : vector<16x8xf32> to vector<2x8x8xf32>
    "tpu.trace_start"() <{level = 10 : i32, message = "bsd,btd->bst"}> : () -> ()
    %cst_21 = arith.constant dense<0.000000e+00> : vector<2x8x8xf32>
    %61 = tpu.matmul %56, %58, %cst_21 {dimension_numbers = #tpu.dot_dimension_numbers<[2], [2], [1], [1], [0, 0, 0, 1, 1, 1], [0], [0]>} : vector<2x8x8xf32>, vector<2x8x8xf32>, vector<2x8x8xf32> -> vector<2x8x8xf32>
    "tpu.trace_stop"() : () -> ()
    %62 = vector.shape_cast %32 : vector<8x8xf32> to vector<1x8x8xf32>
    %63 = vector.broadcast %62 : vector<1x8x8xf32> to vector<2x8x8xf32>
    %64 = arith.addf %61, %63 : vector<2x8x8xf32>
    %cst_22 = arith.constant dense<0xFF800000> : vector<2x8xf32>
    %65 = vector.multi_reduction <maximumf>, %64, %cst_22 [2] : vector<2x8x8xf32> to vector<2x8xf32>
    %66 = vector.shape_cast %65 : vector<2x8xf32> to vector<2x8x1xf32>
    %67 = vector.broadcast %66 : vector<2x8x1xf32> to vector<2x8x8xf32>
    %68 = arith.subf %64, %67 : vector<2x8x8xf32>
    %69 = math.exp %68 : vector<2x8x8xf32>
    %cst_23 = arith.constant dense<0.000000e+00> : vector<2x8xf32>
    %70 = vector.multi_reduction <add>, %69, %cst_23 [2] : vector<2x8x8xf32> to vector<2x8xf32>
    %71 = vector.shape_cast %70 : vector<2x8xf32> to vector<2x8x1xf32>
    %72 = tpu.reciprocal %71 : vector<2x8x1xf32> -> vector<2x8x1xf32>
    %73 = vector.broadcast %72 : vector<2x8x1xf32> to vector<2x8x8xf32>
    %74 = arith.mulf %69, %73 : vector<2x8x8xf32>
    "tpu.trace_start"() <{level = 10 : i32, message = "bst,btd->bsd"}> : () -> ()
    %cst_24 = arith.constant dense<0.000000e+00> : vector<2x8x8xf32>
    %75 = tpu.matmul %74, %60, %cst_24 {dimension_numbers = #tpu.dot_dimension_numbers<[2], [1], [1], [2], [0, 0, 0, 1, 1, 2], [0], [0]>} : vector<2x8x8xf32>, vector<2x8x8xf32>, vector<2x8x8xf32> -> vector<2x8x8xf32>
    "tpu.trace_stop"() : () -> ()
    %76 = vector.shape_cast %75 : vector<2x8x8xf32> to vector<16x8xf32>
    %77 = vector.extract_strided_slice %31 {offsets = [0, 16], sizes = [16, 8], strides = [1, 1]} : vector<16x96xf32> to vector<16x8xf32>
    %78 = vector.shape_cast %77 : vector<16x8xf32> to vector<2x8x8xf32>
    %79 = vector.extract_strided_slice %31 {offsets = [0, 48], sizes = [16, 8], strides = [1, 1]} : vector<16x96xf32> to vector<16x8xf32>
    %80 = vector.shape_cast %79 : vector<16x8xf32> to vector<2x8x8xf32>
    %81 = vector.extract_strided_slice %31 {offsets = [0, 80], sizes = [16, 8], strides = [1, 1]} : vector<16x96xf32> to vector<16x8xf32>
    %82 = vector.shape_cast %81 : vector<16x8xf32> to vector<2x8x8xf32>
    "tpu.trace_start"() <{level = 10 : i32, message = "bsd,btd->bst"}> : () -> ()
    %cst_25 = arith.constant dense<0.000000e+00> : vector<2x8x8xf32>
    %83 = tpu.matmul %78, %80, %cst_25 {dimension_numbers = #tpu.dot_dimension_numbers<[2], [2], [1], [1], [0, 0, 0, 1, 1, 1], [0], [0]>} : vector<2x8x8xf32>, vector<2x8x8xf32>, vector<2x8x8xf32> -> vector<2x8x8xf32>
    "tpu.trace_stop"() : () -> ()
    %84 = vector.shape_cast %32 : vector<8x8xf32> to vector<1x8x8xf32>
    %85 = vector.broadcast %84 : vector<1x8x8xf32> to vector<2x8x8xf32>
    %86 = arith.addf %83, %85 : vector<2x8x8xf32>
    %cst_26 = arith.constant dense<0xFF800000> : vector<2x8xf32>
    %87 = vector.multi_reduction <maximumf>, %86, %cst_26 [2] : vector<2x8x8xf32> to vector<2x8xf32>
    %88 = vector.shape_cast %87 : vector<2x8xf32> to vector<2x8x1xf32>
    %89 = vector.broadcast %88 : vector<2x8x1xf32> to vector<2x8x8xf32>
    %90 = arith.subf %86, %89 : vector<2x8x8xf32>
    %91 = math.exp %90 : vector<2x8x8xf32>
    %cst_27 = arith.constant dense<0.000000e+00> : vector<2x8xf32>
    %92 = vector.multi_reduction <add>, %91, %cst_27 [2] : vector<2x8x8xf32> to vector<2x8xf32>
    %93 = vector.shape_cast %92 : vector<2x8xf32> to vector<2x8x1xf32>
    %94 = tpu.reciprocal %93 : vector<2x8x1xf32> -> vector<2x8x1xf32>
    %95 = vector.broadcast %94 : vector<2x8x1xf32> to vector<2x8x8xf32>
    %96 = arith.mulf %91, %95 : vector<2x8x8xf32>
    "tpu.trace_start"() <{level = 10 : i32, message = "bst,btd->bsd"}> : () -> ()
    %cst_28 = arith.constant dense<0.000000e+00> : vector<2x8x8xf32>
    %97 = tpu.matmul %96, %82, %cst_28 {dimension_numbers = #tpu.dot_dimension_numbers<[2], [1], [1], [2], [0, 0, 0, 1, 1, 2], [0], [0]>} : vector<2x8x8xf32>, vector<2x8x8xf32>, vector<2x8x8xf32> -> vector<2x8x8xf32>
    "tpu.trace_stop"() : () -> ()
    %98 = vector.shape_cast %97 : vector<2x8x8xf32> to vector<16x8xf32>
    %99 = vector.extract_strided_slice %31 {offsets = [0, 24], sizes = [16, 8], strides = [1, 1]} : vector<16x96xf32> to vector<16x8xf32>
    %100 = vector.shape_cast %99 : vector<16x8xf32> to vector<2x8x8xf32>
    %101 = vector.extract_strided_slice %31 {offsets = [0, 56], sizes = [16, 8], strides = [1, 1]} : vector<16x96xf32> to vector<16x8xf32>
    %102 = vector.shape_cast %101 : vector<16x8xf32> to vector<2x8x8xf32>
    %103 = vector.extract_strided_slice %31 {offsets = [0, 88], sizes = [16, 8], strides = [1, 1]} : vector<16x96xf32> to vector<16x8xf32>
    %104 = vector.shape_cast %103 : vector<16x8xf32> to vector<2x8x8xf32>
    "tpu.trace_start"() <{level = 10 : i32, message = "bsd,btd->bst"}> : () -> ()
    %cst_29 = arith.constant dense<0.000000e+00> : vector<2x8x8xf32>
    %105 = tpu.matmul %100, %102, %cst_29 {dimension_numbers = #tpu.dot_dimension_numbers<[2], [2], [1], [1], [0, 0, 0, 1, 1, 1], [0], [0]>} : vector<2x8x8xf32>, vector<2x8x8xf32>, vector<2x8x8xf32> -> vector<2x8x8xf32>
    "tpu.trace_stop"() : () -> ()
    %106 = vector.shape_cast %32 : vector<8x8xf32> to vector<1x8x8xf32>
    %107 = vector.broadcast %106 : vector<1x8x8xf32> to vector<2x8x8xf32>
    %108 = arith.addf %105, %107 : vector<2x8x8xf32>
    %cst_30 = arith.constant dense<0xFF800000> : vector<2x8xf32>
    %109 = vector.multi_reduction <maximumf>, %108, %cst_30 [2] : vector<2x8x8xf32> to vector<2x8xf32>
    %110 = vector.shape_cast %109 : vector<2x8xf32> to vector<2x8x1xf32>
    %111 = vector.broadcast %110 : vector<2x8x1xf32> to vector<2x8x8xf32>
    %112 = arith.subf %108, %111 : vector<2x8x8xf32>
    %113 = math.exp %112 : vector<2x8x8xf32>
    %cst_31 = arith.constant dense<0.000000e+00> : vector<2x8xf32>
    %114 = vector.multi_reduction <add>, %113, %cst_31 [2] : vector<2x8x8xf32> to vector<2x8xf32>
    %115 = vector.shape_cast %114 : vector<2x8xf32> to vector<2x8x1xf32>
    %116 = tpu.reciprocal %115 : vector<2x8x1xf32> -> vector<2x8x1xf32>
    %117 = vector.broadcast %116 : vector<2x8x1xf32> to vector<2x8x8xf32>
    %118 = arith.mulf %113, %117 : vector<2x8x8xf32>
    "tpu.trace_start"() <{level = 10 : i32, message = "bst,btd->bsd"}> : () -> ()
    %cst_32 = arith.constant dense<0.000000e+00> : vector<2x8x8xf32>
    %119 = tpu.matmul %118, %104, %cst_32 {dimension_numbers = #tpu.dot_dimension_numbers<[2], [1], [1], [2], [0, 0, 0, 1, 1, 2], [0], [0]>} : vector<2x8x8xf32>, vector<2x8x8xf32>, vector<2x8x8xf32> -> vector<2x8x8xf32>
    "tpu.trace_stop"() : () -> ()
    %120 = vector.shape_cast %119 : vector<2x8x8xf32> to vector<16x8xf32>
    %121 = tpu.concatenate %54, %76, %98, %120 in 1 : vector<16x8xf32>, vector<16x8xf32>, vector<16x8xf32>, vector<16x8xf32> -> vector<16x32xf32>
    %c0_33 = arith.constant 0 : index
    %c0_34 = arith.constant 0 : index
    %122 = vector.load %arg7[%c0_33, %c0_34] : memref<32x32xf32, #tpu.memory_space<vmem>>, vector<32x32xf32>
    %cst_35 = arith.constant dense<0.000000e+00> : vector<16x32xf32>
    %123 = tpu.matmul %121, %122, %cst_35 {dimension_numbers = #tpu.dot_dimension_numbers<[1], [0], [0], [1], [0, 0, 1, 1], [], []>} : vector<16x32xf32>, vector<32x32xf32>, vector<16x32xf32> -> vector<16x32xf32>
    %c0_36 = arith.constant 0 : index
    %c0_37 = arith.constant 0 : index
    %124 = vector.load %arg8[%c0_36, %c0_37] : memref<1x32xf32, #tpu.memory_space<vmem>>, vector<1x32xf32>
    %125 = vector.broadcast %124 : vector<1x32xf32> to vector<16x32xf32>
    %126 = arith.addf %123, %125 : vector<16x32xf32>
    %127 = arith.addf %126, %0 : vector<16x32xf32>
    %c0_38 = arith.constant 0 : index
    %c0_39 = arith.constant 0 : index
    %128 = vector.load %arg9[%c0_38, %c0_39] : memref<1x32xf32, #tpu.memory_space<vmem>>, vector<1x32xf32>
    %c0_40 = arith.constant 0 : index
    %c0_41 = arith.constant 0 : index
    %129 = vector.load %arg10[%c0_40, %c0_41] : memref<1x32xf32, #tpu.memory_space<vmem>>, vector<1x32xf32>
    %cst_42 = arith.constant dense<0.000000e+00> : vector<16xf32>
    %130 = vector.multi_reduction <add>, %127, %cst_42 [1] : vector<16x32xf32> to vector<16xf32>
    %131 = vector.shape_cast %130 : vector<16xf32> to vector<16x1xf32>
    %cst_43 = arith.constant 3.200000e+01 : f32
    %132 = vector.broadcast %cst_43 : f32 to vector<16x1xf32>
    %133 = arith.divf %131, %132 : vector<16x1xf32>
    %134 = arith.mulf %127, %127 : vector<16x32xf32>
    %cst_44 = arith.constant dense<0.000000e+00> : vector<16xf32>
    %135 = vector.multi_reduction <add>, %134, %cst_44 [1] : vector<16x32xf32> to vector<16xf32>
    %136 = vector.shape_cast %135 : vector<16xf32> to vector<16x1xf32>
    %cst_45 = arith.constant 3.200000e+01 : f32
    %137 = vector.broadcast %cst_45 : f32 to vector<16x1xf32>
    %138 = arith.divf %136, %137 : vector<16x1xf32>
    %139 = arith.mulf %133, %133 : vector<16x1xf32>
    %140 = arith.subf %138, %139 : vector<16x1xf32>
    %cst_46 = arith.constant 0.000000e+00 : f32
    %141 = vector.broadcast %cst_46 : f32 to vector<16x1xf32>
    %142 = arith.maximumf %140, %141 : vector<16x1xf32>
    %143 = vector.broadcast %133 : vector<16x1xf32> to vector<16x32xf32>
    %144 = arith.subf %127, %143 : vector<16x32xf32>
    %cst_47 = arith.constant 9.99999974E-6 : f32
    %145 = vector.broadcast %cst_47 : f32 to vector<16x1xf32>
    %146 = arith.addf %142, %145 : vector<16x1xf32>
    %147 = math.rsqrt %146 : vector<16x1xf32>
    %148 = vector.broadcast %147 : vector<16x1xf32> to vector<16x32xf32>
    %149 = arith.mulf %144, %148 : vector<16x32xf32>
    %150 = vector.broadcast %128 : vector<1x32xf32> to vector<16x32xf32>
    %151 = arith.mulf %149, %150 : vector<16x32xf32>
    %152 = vector.broadcast %129 : vector<1x32xf32> to vector<16x32xf32>
    %153 = arith.addf %151, %152 : vector<16x32xf32>
    %c0_48 = arith.constant 0 : index
    %c0_49 = arith.constant 0 : index
    %154 = vector.load %arg11[%c0_48, %c0_49] : memref<32x128xf32, #tpu.memory_space<vmem>>, vector<32x128xf32>
    %cst_50 = arith.constant dense<0.000000e+00> : vector<16x128xf32>
    %155 = tpu.matmul %153, %154, %cst_50 {dimension_numbers = #tpu.dot_dimension_numbers<[1], [0], [0], [1], [0, 0, 1, 1], [], []>} : vector<16x32xf32>, vector<32x128xf32>, vector<16x128xf32> -> vector<16x128xf32>
    %c0_51 = arith.constant 0 : index
    %c0_52 = arith.constant 0 : index
    %156 = vector.load %arg12[%c0_51, %c0_52] : memref<1x128xf32, #tpu.memory_space<vmem>>, vector<1x128xf32>
    %157 = vector.broadcast %156 : vector<1x128xf32> to vector<16x128xf32>
    %158 = arith.addf %155, %157 : vector<16x128xf32>
    %cst_53 = arith.constant 0.000000e+00 : f32
    %159 = vector.broadcast %cst_53 : f32 to vector<16x128xf32>
    %160 = arith.cmpf oge, %158, %159 : vector<16x128xf32>
    %cst_54 = arith.constant 0.00999999977 : f32
    %161 = vector.broadcast %cst_54 : f32 to vector<16x128xf32>
    %162 = arith.mulf %161, %158 : vector<16x128xf32>
    %163 = arith.select %160, %158, %162 : vector<16x128xi1>, vector<16x128xf32>
    %c0_55 = arith.constant 0 : index
    %c0_56 = arith.constant 0 : index
    %164 = vector.load %arg13[%c0_55, %c0_56] : memref<128x32xf32, #tpu.memory_space<vmem>>, vector<128x32xf32>
    %cst_57 = arith.constant dense<0.000000e+00> : vector<16x32xf32>
    %165 = tpu.matmul %163, %164, %cst_57 {dimension_numbers = #tpu.dot_dimension_numbers<[1], [0], [0], [1], [0, 0, 1, 1], [], []>} : vector<16x128xf32>, vector<128x32xf32>, vector<16x32xf32> -> vector<16x32xf32>
    %c0_58 = arith.constant 0 : index
    %c0_59 = arith.constant 0 : index
    %166 = vector.load %arg14[%c0_58, %c0_59] : memref<1x32xf32, #tpu.memory_space<vmem>>, vector<1x32xf32>
    %167 = vector.broadcast %166 : vector<1x32xf32> to vector<16x32xf32>
    %168 = arith.addf %165, %167 : vector<16x32xf32>
    %169 = arith.addf %168, %153 : vector<16x32xf32>
    %c0_60 = arith.constant 0 : index
    %c0_61 = arith.constant 0 : index
    %170 = vector.load %arg15[%c0_60, %c0_61] : memref<16x32xf32, #tpu.memory_space<vmem>>, vector<16x32xf32>
    tpu.vector_store %arg15[%c0_60, %c0_61], %169 {strides = array<i32>} : memref<16x32xf32, #tpu.memory_space<vmem>>, vector<16x32xf32>,
    return
  }
  func.func @transform_0(%arg0: i32) -> (i32, i32) {
    %c0_i32 = arith.constant 0 : i32
    %c0_i32_0 = arith.constant 0 : i32
    return %arg0, %c0_i32 : i32, i32
  }
  func.func @transform_1(%arg0: i32) -> (i32, i32) {
    %c0_i32 = arith.constant 0 : i32
    %c0_i32_0 = arith.constant 0 : i32
    %c0_i32_1 = arith.constant 0 : i32
    return %c0_i32, %c0_i32_0 : i32, i32
  }
  func.func @transform_2(%arg0: i32) -> (i32, i32) {
    %c0_i32 = arith.constant 0 : i32
    %c0_i32_0 = arith.constant 0 : i32
    %c0_i32_1 = arith.constant 0 : i32
    return %c0_i32, %c0_i32_0 : i32, i32
  }
  func.func @transform_3(%arg0: i32) -> (i32, i32) {
    %c0_i32 = arith.constant 0 : i32
    %c0_i32_0 = arith.constant 0 : i32
    %c0_i32_1 = arith.constant 0 : i32
    return %c0_i32, %c0_i32_0 : i32, i32
  }
  func.func @transform_4(%arg0: i32) -> (i32, i32) {
    %c0_i32 = arith.constant 0 : i32
    %c0_i32_0 = arith.constant 0 : i32
    %c0_i32_1 = arith.constant 0 : i32
    return %c0_i32, %c0_i32_0 : i32, i32
  }
  func.func @transform_5(%arg0: i32) -> (i32, i32) {
    %c0_i32 = arith.constant 0 : i32
    %c0_i32_0 = arith.constant 0 : i32
    %c0_i32_1 = arith.constant 0 : i32
    return %c0_i32, %c0_i32_0 : i32, i32
  }
  func.func @transform_6(%arg0: i32) -> (i32, i32) {
    %c0_i32 = arith.constant 0 : i32
    %c0_i32_0 = arith.constant 0 : i32
    %c0_i32_1 = arith.constant 0 : i32
    return %c0_i32, %c0_i32_0 : i32, i32
  }
  func.func @transform_7(%arg0: i32) -> (i32, i32) {
    %c0_i32 = arith.constant 0 : i32
    %c0_i32_0 = arith.constant 0 : i32
    %c0_i32_1 = arith.constant 0 : i32
    return %c0_i32, %c0_i32_0 : i32, i32
  }
  func.func @transform_8(%arg0: i32) -> (i32, i32) {
    %c0_i32 = arith.constant 0 : i32
    %c0_i32_0 = arith.constant 0 : i32
    %c0_i32_1 = arith.constant 0 : i32
    return %c0_i32, %c0_i32_0 : i32, i32
  }
  func.func @transform_9(%arg0: i32) -> (i32, i32) {
    %c0_i32 = arith.constant 0 : i32
    %c0_i32_0 = arith.constant 0 : i32
    %c0_i32_1 = arith.constant 0 : i32
    return %c0_i32, %c0_i32_0 : i32, i32
  }
  func.func @transform_10(%arg0: i32) -> (i32, i32) {
    %c0_i32 = arith.constant 0 : i32
    %c0_i32_0 = arith.constant 0 : i32
    %c0_i32_1 = arith.constant 0 : i32
    return %c0_i32, %c0_i32_0 : i32, i32
  }
  func.func @transform_11(%arg0: i32) -> (i32, i32) {
    %c0_i32 = arith.constant 0 : i32
    %c0_i32_0 = arith.constant 0 : i32
    %c0_i32_1 = arith.constant 0 : i32
    return %c0_i32, %c0_i32_0 : i32, i32
  }
  func.func @transform_12(%arg0: i32) -> (i32, i32) {
    %c0_i32 = arith.constant 0 : i32
    %c0_i32_0 = arith.constant 0 : i32
    %c0_i32_1 = arith.constant 0 : i32
    return %c0_i32, %c0_i32_0 : i32, i32
  }
  func.func @transform_13(%arg0: i32) -> (i32, i32) {
    %c0_i32 = arith.constant 0 : i32
    %c0_i32_0 = arith.constant 0 : i32
    %c0_i32_1 = arith.constant 0 : i32
    return %c0_i32, %c0_i32_0 : i32, i32
  }
  func.func @transform_14(%arg0: i32) -> (i32, i32) {
    %c0_i32 = arith.constant 0 : i32
    %c0_i32_0 = arith.constant 0 : i32
    return %arg0, %c0_i32 : i32, i32
  }
}

</mosaic_0001>

<llo_original>
// kernel: tpu_custom_call.1
$region0: #{tpu_custom_call.1}
  #allocation0 [shape = 'u32[]', space=smem, size = 0x4, offset = 0x4, fixed_abs, tag = 'smem constant byte address 0x4 - core index']
  #allocation1 [shape = 'u32[144,128]{1,0:T(1,128)}', space=vmem, size = 0x12000, scoped, tag = 'internal scratch']
  %s0 = inlined_call_operand.vmem [shape: f32[16,32], index: 0, kind: input, shape index: {}]
  %s1 = inlined_call_operand.vmem [shape: f32[8,8], index: 1, kind: input, shape index: {}]
  %s2 = inlined_call_operand.vmem [shape: f32[1,32], index: 2, kind: input, shape index: {}]
  %s3 = inlined_call_operand.vmem [shape: f32[1,32], index: 3, kind: input, shape index: {}]
  %s4 = inlined_call_operand.vmem [shape: f32[32,96], index: 4, kind: input, shape index: {}]
  %s5 = inlined_call_operand.vmem [shape: f32[1,96], index: 5, kind: input, shape index: {}]
  %s6 = inlined_call_operand.vmem [shape: f32[32,32], index: 6, kind: input, shape index: {}]
  %s7 = inlined_call_operand.vmem [shape: f32[1,32], index: 7, kind: input, shape index: {}]
  %s8 = inlined_call_operand.vmem [shape: f32[1,32], index: 8, kind: input, shape index: {}]
  %s9 = inlined_call_operand.vmem [shape: f32[1,32], index: 9, kind: input, shape index: {}]
  %s10 = inlined_call_operand.vmem [shape: f32[32,128], index: 10, kind: input, shape index: {}]
  %s11 = inlined_call_operand.vmem [shape: f32[1,128], index: 11, kind: input, shape index: {}]
  %s12 = inlined_call_operand.vmem [shape: f32[128,32], index: 12, kind: input, shape index: {}]
  %s13 = inlined_call_operand.vmem [shape: f32[1,32], index: 13, kind: input, shape index: {}]
  %s14 = inlined_call_operand.hbm [shape: f32[16,32], index: 14, kind: output, shape index: {}]
  %s15 = sld [smem:[#allocation0]]
  $region66: #{tpu_custom_call.1} parent=0
    _
  %s17 = ssub.s32 1, %s15
  %s18 = scalar_select 0, %s17, %s15
  $region1: #{tpu_custom_call.1} parent=0
    #allocation2 [shape = 'u8[8192]{0}', space=vmem, size = 0x2000, scoped, tag = 'output window, operand 0, single buffered']
    #allocation3 [shape = 's32[1]{0}', space=sflag, size = 0x4, scoped, tag = 'scoped memory for tpu_custom_call.1']
    %19 = vsyncpa [#allocation3], 0
    // Predicated region
    $region2: #{tpu_custom_call.1} parent=1 // pred_check
      _
    $region3: #{tpu_custom_call.1} parent=1 // pred_check_branch
      %21 = sbr.rel (0) target = $region5
    $region4: #{tpu_custom_call.1} parent=1 // pred_region
      _
    $region5: #{tpu_custom_call.1} parent=1 // pred_fallthru
      _
    // Predicated region
    $region6: #{tpu_custom_call.1} parent=1 // pred_check
      _
    $region7: #{tpu_custom_call.1} parent=1 // pred_check_branch
      %23 = sbr.rel (0) target = $region9
    $region8: #{tpu_custom_call.1} parent=1 // pred_region
      _
    $region9: #{tpu_custom_call.1} parent=1 // pred_fallthru
      _
    // Predicated region
    $region10: #{tpu_custom_call.1} parent=1 // pred_check
      _
    $region11: #{tpu_custom_call.1} parent=1 // pred_check_branch
      %25 = sbr.rel (0) target = $region13
    $region12: #{tpu_custom_call.1} parent=1 // pred_region
      _
    $region13: #{tpu_custom_call.1} parent=1 // pred_fallthru
      _
    // Predicated region
    $region14: #{tpu_custom_call.1} parent=1 // pred_check
      _
    $region15: #{tpu_custom_call.1} parent=1 // pred_check_branch
      %27 = sbr.rel (0) target = $region17
    $region16: #{tpu_custom_call.1} parent=1 // pred_region
      _
    $region17: #{tpu_custom_call.1} parent=1 // pred_fallthru
      _
    // Predicated region
    $region18: #{tpu_custom_call.1} parent=1 // pred_check
      _
    $region19: #{tpu_custom_call.1} parent=1 // pred_check_branch
      %29 = sbr.rel (0) target = $region21
    $region20: #{tpu_custom_call.1} parent=1 // pred_region
      _
    $region21: #{tpu_custom_call.1} parent=1 // pred_fallthru
      _
    // Predicated region
    $region22: #{tpu_custom_call.1} parent=1 // pred_check
      _
    $region23: #{tpu_custom_call.1} parent=1 // pred_check_branch
      %31 = sbr.rel (0) target = $region25
    $region24: #{tpu_custom_call.1} parent=1 // pred_region
      _
    $region25: #{tpu_custom_call.1} parent=1 // pred_fallthru
      _
    // Predicated region
    $region26: #{tpu_custom_call.1} parent=1 // pred_check
      _
    $region27: #{tpu_custom_call.1} parent=1 // pred_check_branch
      %33 = sbr.rel (0) target = $region29
    $region28: #{tpu_custom_call.1} parent=1 // pred_region
      _
    $region29: #{tpu_custom_call.1} parent=1 // pred_fallthru
      _
    // Predicated region
    $region30: #{tpu_custom_call.1} parent=1 // pred_check
      _
    $region31: #{tpu_custom_call.1} parent=1 // pred_check_branch
      %35 = sbr.rel (0) target = $region33
    $region32: #{tpu_custom_call.1} parent=1 // pred_region
      _
    $region33: #{tpu_custom_call.1} parent=1 // pred_fallthru
      _
    // Predicated region
    $region34: #{tpu_custom_call.1} parent=1 // pred_check
      _
    $region35: #{tpu_custom_call.1} parent=1 // pred_check_branch
      %37 = sbr.rel (0) target = $region37
    $region36: #{tpu_custom_call.1} parent=1 // pred_region
      _
    $region37: #{tpu_custom_call.1} parent=1 // pred_fallthru
      _
    // Predicated region
    $region38: #{tpu_custom_call.1} parent=1 // pred_check
      _
    $region39: #{tpu_custom_call.1} parent=1 // pred_check_branch
      %39 = sbr.rel (0) target = $region41
    $region40: #{tpu_custom_call.1} parent=1 // pred_region
      _
    $region41: #{tpu_custom_call.1} parent=1 // pred_fallthru
      _
    // Predicated region
    $region42: #{tpu_custom_call.1} parent=1 // pred_check
      _
    $region43: #{tpu_custom_call.1} parent=1 // pred_check_branch
      %41 = sbr.rel (0) target = $region45
    $region44: #{tpu_custom_call.1} parent=1 // pred_region
      _
    $region45: #{tpu_custom_call.1} parent=1 // pred_fallthru
      _
    // Predicated region
    $region46: #{tpu_custom_call.1} parent=1 // pred_check
      _
    $region47: #{tpu_custom_call.1} parent=1 // pred_check_branch
      %43 = sbr.rel (0) target = $region49
    $region48: #{tpu_custom_call.1} parent=1 // pred_region
      _
    $region49: #{tpu_custom_call.1} parent=1 // pred_fallthru
      _
    // Predicated region
    $region50: #{tpu_custom_call.1} parent=1 // pred_check
      _
    $region51: #{tpu_custom_call.1} parent=1 // pred_check_branch
      %45 = sbr.rel (0) target = $region53
    $region52: #{tpu_custom_call.1} parent=1 // pred_region
      _
    $region53: #{tpu_custom_call.1} parent=1 // pred_fallthru
      _
    // Predicated region
    $region54: #{tpu_custom_call.1} parent=1 // pred_check
      _
    $region55: #{tpu_custom_call.1} parent=1 // pred_check_branch
      %47 = sbr.rel (0) target = $region57
    $region56: #{tpu_custom_call.1} parent=1 // pred_region
      _
    $region57: #{tpu_custom_call.1} parent=1 // pred_fallthru
      _
    %v48 = vld [vmem:[%s0] sm:$0xff]
    %v49 = vld [vmem:[%s0 + $0x8] sm:$0xff]
    %v50 = vld [vmem:[%s2] sm:$0x1]
    %v51 = vld [vmem:[%s3] sm:$0x1]
    %vm52 = vcmask 261120
    %v53 = vsel %vm52, %v48, 0.0
    %54 = vadd.xlane.f32.xlu0 %v53
    %v55 = vpop.xlane.xlu0 %54
    %v56 = vsel %vm52, %v49, 0.0
    %57 = vadd.xlane.f32.xlu0 %v56
    %v58 = vpop.xlane.xlu0 %57
    %v59 = vrcp.pop 32.0
    %v60 = vmul.f32 %v55, %v59
    %v61 = vmul.f32 %v58, %v59
    %v62 = vmul.f32 %v48, %v48
    %v63 = vmul.f32 %v49, %v49
    %v64 = vsel %vm52, %v62, 0.0
    %65 = vadd.xlane.f32.xlu0 %v64
    %v66 = vpop.xlane.xlu0 %65
    %v67 = vsel %vm52, %v63, 0.0
    %68 = vadd.xlane.f32.xlu0 %v67
    %v69 = vpop.xlane.xlu0 %68
    %v70 = vmul.f32 %v66, %v59
    %v71 = vmul.f32 %v69, %v59
    %v72 = vmul.f32 %v60, %v60
    %v73 = vmul.f32 %v61, %v61
    %v74 = vsub.f32 %v70, %v72
    %v75 = vsub.f32 %v71, %v73
    %v76 = vmax.f32 %v74, 0.0
    %v77 = vmax.f32 %v75, 0.0
    %v78 = vsub.f32 %v48, %v60
    %v79 = vsub.f32 %v49, %v61
    %v80 = vadd.f32 %v76, 1e-05
    %v81 = vadd.f32 %v77, 1e-05
    %v82 = vrsqrt.pop %v80
    %v83 = vrsqrt.pop %v81
    %v84 = vmul.f32 %v78, %v82
    %v85 = vmul.f32 %v79, %v83
    %v87 = vlaneseq
    %v88 = vshrl.u32 %v87, 7
    %v89 = vsub.s32 0, %v88
    %v90 = vrot.slane %v50, %v89
    %v92 = vmul.f32 %v84, %v90
    %v93 = vmul.f32 %v85, %v90
    %v95 = vlaneseq
    %v96 = vshrl.u32 %v95, 7
    %v97 = vsub.s32 0, %v96
    %v98 = vrot.slane %v51, %v97
    %v100 = vadd.f32 %v92, %v98
    %v101 = vadd.f32 %v93, %v98
    %v102 = vld [vmem:[%s4] sm:$0xff]
    %v103 = vld [vmem:[%s4 + $0x8] sm:$0xff]
    %v104 = vld [vmem:[%s4 + $0x10] sm:$0xff]
    %v105 = vld [vmem:[%s4 + $0x18] sm:$0xff]
    %v106 = vld [vmem:[%s5] sm:$0x1]
    %v108 = vlaneseq
    %v109 = vshrl.u32 %v108, 7
    %v110 = vsub.s32 0, %v109
    %v111 = vrot.slane %v106, %v110
    %v114 = vsel %vm52, %v100, 0
    %v117 = vsel %vm52, %v101, 0
    %119 = vmatprep.subr.mxu0 0.0
    %120 = vmatpush1.msra.mxu0 %v102
    %121 = vmatprep.subr.mxu0 0.0
    %122 = vmatpush1.msra.mxu0 %v103
    %123 = vmatprep.subr.mxu0 0.0
    %124 = vmatpush1.msra.mxu0 %v104
    %125 = vmatprep.subr.mxu0 0.0
    %126 = vmatpush1.msra.mxu0 %v105
    %127 = vmatprep.subr.mxu0 0.0
    %128 = vmatpush1.msra.mxu0 0.0
    %129 = vmatprep.subr.mxu0 0.0
    %130 = vmatpush1.msra.mxu0 0.0
    %131 = vmatprep.subr.mxu0 0.0
    %132 = vmatpush1.msra.mxu0 0.0
    %133 = vmatprep.subr.mxu0 0.0
    %134 = vmatpush1.msra.mxu0 0.0
    %135 = vmatprep.subr.mxu0 0.0
    %136 = vmatpush1.msra.mxu0 0.0
    %137 = vmatprep.subr.mxu0 0.0
    %138 = vmatpush1.msra.mxu0 0.0
    %139 = vmatprep.subr.mxu0 0.0
    %140 = vmatpush1.msra.mxu0 0.0
    %141 = vmatprep.subr.mxu0 0.0
    %142 = vmatpush1.msra.mxu0 0.0
    %143 = vmatprep.subr.mxu0 0.0
    %144 = vmatpush1.msra.mxu0 0.0
    %145 = vmatprep.subr.mxu0 0.0
    %146 = vmatpush1.msra.mxu0 0.0
    %147 = vmatprep.subr.mxu0 0.0
    %148 = vmatpush1.msra.mxu0 0.0
    %149 = vmatprep.subr.mxu0 0.0
    %150 = vmatpush1.msra.mxu0 0.0
    %151 = vmatprep.subr.mxu0 0.0
    %152 = vmatpush1.msra.mxu0 0.0
    %153 = vmatprep.subr.mxu0 0.0
    %154 = vmatpush1.msra.mxu0 0.0
    %155 = vmatprep.subr.mxu0 0.0
    %156 = vmatpush1.msra.mxu0 0.0
    %157 = vmatprep.subr.mxu0 0.0
    %158 = vmatpush1.msra.mxu0 0.0
    %159 = vmatprep.subr.mxu0 0.0
    %160 = vmatpush1.msra.mxu0 0.0
    %161 = vmatprep.subr.mxu0 0.0
    %162 = vmatpush1.msra.mxu0 0.0
    %163 = vmatprep.subr.mxu0 0.0
    %164 = vmatpush1.msra.mxu0 0.0
    %165 = vmatprep.subr.mxu0 0.0
    %166 = vmatpush1.msra.mxu0 0.0
    %167 = vmatprep.subr.mxu0 0.0
    %168 = vmatpush1.msra.mxu0 0.0
    %169 = vmatprep.subr.mxu0 0.0
    %170 = vmatpush1.msra.mxu0 0.0
    %171 = vmatprep.subr.mxu0 0.0
    %172 = vmatpush1.msra.mxu0 0.0
    %173 = vmatprep.subr.mxu0 0.0
    %174 = vmatpush1.msra.mxu0 0.0
    %175 = vmatprep.subr.mxu0 0.0
    %176 = vmatpush1.msra.mxu0 0.0
    %177 = vmatprep.subr.mxu0 0.0
    %178 = vmatpush1.msra.mxu0 0.0
    %179 = vmatprep.subr.mxu0 0.0
    %180 = vmatpush1.msra.mxu0 0.0
    %181 = vmatprep.subr.mxu0 0.0
    %182 = vmatpush1.msra.mxu0 0.0
    %183 = vmatprep.mubr.f32.mxu0 0.0
    %184 = vmatmul.mubr.f32.gmra.mrb[0].mxu0 %v114
    %v185 = vpop.f32.mrb[0].mxu0
    %v186 = vadd.f32 %v111, %v185
    %v187 = vpop.f32.mrb[0].mxu0
    %188 = vmatprep.mubr.f32.mxu0 0.0
    %189 = vmatmul.mubr.f32.gmra.mrb[0].mxu0 %v117
    %v190 = vpop.f32.mrb[0].mxu0
    %v191 = vadd.f32 %v111, %v190
    %v192 = vpop.f32.mrb[0].mxu0
    %193 = vdwg.mxu0
    %v194 = vld [vmem:[%s1] sm:$0xff]
    %196 = vrot.lane.b32.xlu0 %v186, 96
    %v197 = vpop.permute.xlu0 %196
    %vm198 = vcmask 64512
    %v199 = vsel %vm198, %v186, 0
    %v201 = vsel %vm198, %v197, 0
    %203 = vmatprep.subr.mxu0 0.0
    %204 = vmatpush1.xpose.msra.mxu0 %v201
    %205 = vmatprep.subr.mxu0 0.0
    %206 = vmatpush1.xpose.msra.mxu0 0.0
    %207 = vmatprep.subr.mxu0 0.0
    %208 = vmatpush1.xpose.msra.mxu0 0.0
    %209 = vmatprep.subr.mxu0 0.0
    %210 = vmatpush1.xpose.msra.mxu0 0.0
    %211 = vmatprep.subr.mxu0 0.0
    %212 = vmatpush1.xpose.msra.mxu0 0.0
    %213 = vmatprep.subr.mxu0 0.0
    %214 = vmatpush1.xpose.msra.mxu0 0.0
    %215 = vmatprep.subr.mxu0 0.0
    %216 = vmatpush1.xpose.msra.mxu0 0.0
    %217 = vmatprep.subr.mxu0 0.0
    %218 = vmatpush1.xpose.msra.mxu0 0.0
    %219 = vmatprep.subr.mxu0 0.0
    %220 = vmatpush1.xpose.msra.mxu0 0.0
    %221 = vmatprep.subr.mxu0 0.0
    %222 = vmatpush1.xpose.msra.mxu0 0.0
    %223 = vmatprep.subr.mxu0 0.0
    %224 = vmatpush1.xpose.msra.mxu0 0.0
    %225 = vmatprep.subr.mxu0 0.0
    %226 = vmatpush1.xpose.msra.mxu0 0.0
    %227 = vmatprep.subr.mxu0 0.0
    %228 = vmatpush1.xpose.msra.mxu0 0.0
    %229 = vmatprep.subr.mxu0 0.0
    %230 = vmatpush1.xpose.msra.mxu0 0.0
    %231 = vmatprep.subr.mxu0 0.0
    %232 = vmatpush1.xpose.msra.mxu0 0.0
    %233 = vmatprep.subr.mxu0 0.0
    %234 = vmatpush1.xpose.msra.mxu0 0.0
    %235 = vmatprep.subr.mxu0 0.0
    %236 = vmatpush1.xpose.msra.mxu0 0.0
    %237 = vmatprep.subr.mxu0 0.0
    %238 = vmatpush1.xpose.msra.mxu0 0.0
    %239 = vmatprep.subr.mxu0 0.0
    %240 = vmatpush1.xpose.msra.mxu0 0.0
    %241 = vmatprep.subr.mxu0 0.0
    %242 = vmatpush1.xpose.msra.mxu0 0.0
    %243 = vmatprep.subr.mxu0 0.0
    %244 = vmatpush1.xpose.msra.mxu0 0.0
    %245 = vmatprep.subr.mxu0 0.0
    %246 = vmatpush1.xpose.msra.mxu0 0.0
    %247 = vmatprep.subr.mxu0 0.0
    %248 = vmatpush1.xpose.msra.mxu0 0.0
    %249 = vmatprep.subr.mxu0 0.0
    %250 = vmatpush1.xpose.msra.mxu0 0.0
    %251 = vmatprep.subr.mxu0 0.0
    %252 = vmatpush1.xpose.msra.mxu0 0.0
    %253 = vmatprep.subr.mxu0 0.0
    %254 = vmatpush1.xpose.msra.mxu0 0.0
    %255 = vmatprep.subr.mxu0 0.0
    %256 = vmatpush1.xpose.msra.mxu0 0.0
    %257 = vmatprep.subr.mxu0 0.0
    %258 = vmatpush1.xpose.msra.mxu0 0.0
    %259 = vmatprep.subr.mxu0 0.0
    %260 = vmatpush1.xpose.msra.mxu0 0.0
    %261 = vmatprep.subr.mxu0 0.0
    %262 = vmatpush1.xpose.msra.mxu0 0.0
    %263 = vmatprep.subr.mxu0 0.0
    %264 = vmatpush1.xpose.msra.mxu0 0.0
    %265 = vmatprep.subr.mxu0 0.0
    %266 = vmatpush1.xpose.msra.mxu0 0.0
    %267 = vmatprep.mubr.f32.mxu0 0.0
    %268 = vmatmul.mubr.f32.gmra.mrb[0].mxu0 %v199
    %v269 = vpop.f32.mrb[0].mxu0
    %v270 = vadd.f32 %v194, %v269
    %v271 = vpop.f32.mrb[0].mxu0
    %272 = vdwg.mxu0
    %274 = vrot.lane.b32.xlu0 %v191, 96
    %v275 = vpop.permute.xlu0 %274
    %v276 = vsel %vm198, %v191, 0
    %v278 = vsel %vm198, %v275, 0
    %280 = vmatprep.subr.mxu0 0.0
    %281 = vmatpush1.xpose.msra.mxu0 %v278
    %282 = vmatprep.subr.mxu0 0.0
    %283 = vmatpush1.xpose.msra.mxu0 0.0
    %284 = vmatprep.subr.mxu0 0.0
    %285 = vmatpush1.xpose.msra.mxu0 0.0
    %286 = vmatprep.subr.mxu0 0.0
    %287 = vmatpush1.xpose.msra.mxu0 0.0
    %288 = vmatprep.subr.mxu0 0.0
    %289 = vmatpush1.xpose.msra.mxu0 0.0
    %290 = vmatprep.subr.mxu0 0.0
    %291 = vmatpush1.xpose.msra.mxu0 0.0
    %292 = vmatprep.subr.mxu0 0.0
    %293 = vmatpush1.xpose.msra.mxu0 0.0
    %294 = vmatprep.subr.mxu0 0.0
    %295 = vmatpush1.xpose.msra.mxu0 0.0
    %296 = vmatprep.subr.mxu0 0.0
    %297 = vmatpush1.xpose.msra.mxu0 0.0
    %298 = vmatprep.subr.mxu0 0.0
    %299 = vmatpush1.xpose.msra.mxu0 0.0
    %300 = vmatprep.subr.mxu0 0.0
    %301 = vmatpush1.xpose.msra.mxu0 0.0
    %302 = vmatprep.subr.mxu0 0.0
    %303 = vmatpush1.xpose.msra.mxu0 0.0
    %304 = vmatprep.subr.mxu0 0.0
    %305 = vmatpush1.xpose.msra.mxu0 0.0
    %306 = vmatprep.subr.mxu0 0.0
    %307 = vmatpush1.xpose.msra.mxu0 0.0
    %308 = vmatprep.subr.mxu0 0.0
    %309 = vmatpush1.xpose.msra.mxu0 0.0
    %310 = vmatprep.subr.mxu0 0.0
    %311 = vmatpush1.xpose.msra.mxu0 0.0
    %312 = vmatprep.subr.mxu0 0.0
    %313 = vmatpush1.xpose.msra.mxu0 0.0
    %314 = vmatprep.subr.mxu0 0.0
    %315 = vmatpush1.xpose.msra.mxu0 0.0
    %316 = vmatprep.subr.mxu0 0.0
    %317 = vmatpush1.xpose.msra.mxu0 0.0
    %318 = vmatprep.subr.mxu0 0.0
    %319 = vmatpush1.xpose.msra.mxu0 0.0
    %320 = vmatprep.subr.mxu0 0.0
    %321 = vmatpush1.xpose.msra.mxu0 0.0
    %322 = vmatprep.subr.mxu0 0.0
    %323 = vmatpush1.xpose.msra.mxu0 0.0
    %324 = vmatprep.subr.mxu0 0.0
    %325 = vmatpush1.xpose.msra.mxu0 0.0
    %326 = vmatprep.subr.mxu0 0.0
    %327 = vmatpush1.xpose.msra.mxu0 0.0
    %328 = vmatprep.subr.mxu0 0.0
    %329 = vmatpush1.xpose.msra.mxu0 0.0
    %330 = vmatprep.subr.mxu0 0.0
    %331 = vmatpush1.xpose.msra.mxu0 0.0
    %332 = vmatprep.subr.mxu0 0.0
    %333 = vmatpush1.xpose.msra.mxu0 0.0
    %334 = vmatprep.subr.mxu0 0.0
    %335 = vmatpush1.xpose.msra.mxu0 0.0
    %336 = vmatprep.subr.mxu0 0.0
    %337 = vmatpush1.xpose.msra.mxu0 0.0
    %338 = vmatprep.subr.mxu0 0.0
    %339 = vmatpush1.xpose.msra.mxu0 0.0
    %340 = vmatprep.subr.mxu0 0.0
    %341 = vmatpush1.xpose.msra.mxu0 0.0
    %342 = vmatprep.subr.mxu0 0.0
    %343 = vmatpush1.xpose.msra.mxu0 0.0
    %344 = vmatprep.mubr.f32.mxu0 0.0
    %345 = vmatmul.mubr.f32.gmra.mrb[0].mxu0 %v276
    %v346 = vpop.f32.mrb[0].mxu0
    %v347 = vadd.f32 %v194, %v346
    %v348 = vpop.f32.mrb[0].mxu0
    %349 = vdwg.mxu0
    %v350 = vsel %vm198, %v270, -inf
    %351 = vmax.xlane.f32.xlu0 %v350
    %v352 = vpop.xlane.xlu0 %351
    %v353 = vsel %vm198, %v347, -inf
    %354 = vmax.xlane.f32.xlu0 %v353
    %v355 = vpop.xlane.xlu0 %354
    %v356 = vsub.f32 %v270, %v352
    %v357 = vsub.f32 %v347, %v355
    %v358 = vmul.f32 %v356, 1.442695
    %v359 = vpow.pop %v358
    %v360 = vmul.f32 %v357, 1.442695
    %v361 = vpow.pop %v360
    %v362 = vsel %vm198, %v359, 0.0
    %363 = vadd.xlane.f32.xlu0 %v362
    %v364 = vpop.xlane.xlu0 %363
    %v365 = vsel %vm198, %v361, 0.0
    %366 = vadd.xlane.f32.xlu0 %v365
    %v367 = vpop.xlane.xlu0 %366
    %v368 = vrcp.pop %v364
    %v369 = vrcp.pop %v367
    %v370 = vmul.f32 %v359, %v368
    %v371 = vmul.f32 %v361, %v369
    %372 = vrot.lane.b32.xlu0 %v186, 64
    %v373 = vpop.permute.xlu0 %372
    %v376 = vsel %vm198, %v370, 0
    %378 = vmatprep.subr.mxu0 0.0
    %379 = vmatpush1.msra.mxu0 %v373
    %380 = vmatprep.subr.mxu0 0.0
    %381 = vmatpush1.msra.mxu0 0.0
    %382 = vmatprep.subr.mxu0 0.0
    %383 = vmatpush1.msra.mxu0 0.0
    %384 = vmatprep.subr.mxu0 0.0
    %385 = vmatpush1.msra.mxu0 0.0
    %386 = vmatprep.subr.mxu0 0.0
    %387 = vmatpush1.msra.mxu0 0.0
    %388 = vmatprep.subr.mxu0 0.0
    %389 = vmatpush1.msra.mxu0 0.0
    %390 = vmatprep.subr.mxu0 0.0
    %391 = vmatpush1.msra.mxu0 0.0
    %392 = vmatprep.subr.mxu0 0.0
    %393 = vmatpush1.msra.mxu0 0.0
    %394 = vmatprep.subr.mxu0 0.0
    %395 = vmatpush1.msra.mxu0 0.0
    %396 = vmatprep.subr.mxu0 0.0
    %397 = vmatpush1.msra.mxu0 0.0
    %398 = vmatprep.subr.mxu0 0.0
    %399 = vmatpush1.msra.mxu0 0.0
    %400 = vmatprep.subr.mxu0 0.0
    %401 = vmatpush1.msra.mxu0 0.0
    %402 = vmatprep.subr.mxu0 0.0
    %403 = vmatpush1.msra.mxu0 0.0
    %404 = vmatprep.subr.mxu0 0.0
    %405 = vmatpush1.msra.mxu0 0.0
    %406 = vmatprep.subr.mxu0 0.0
    %407 = vmatpush1.msra.mxu0 0.0
    %408 = vmatprep.subr.mxu0 0.0
    %409 = vmatpush1.msra.mxu0 0.0
    %410 = vmatprep.subr.mxu0 0.0
    %411 = vmatpush1.msra.mxu0 0.0
    %412 = vmatprep.subr.mxu0 0.0
    %413 = vmatpush1.msra.mxu0 0.0
    %414 = vmatprep.subr.mxu0 0.0
    %415 = vmatpush1.msra.mxu0 0.0
    %416 = vmatprep.subr.mxu0 0.0
    %417 = vmatpush1.msra.mxu0 0.0
    %418 = vmatprep.subr.mxu0 0.0
    %419 = vmatpush1.msra.mxu0 0.0
    %420 = vmatprep.subr.mxu0 0.0
    %421 = vmatpush1.msra.mxu0 0.0
    %422 = vmatprep.subr.mxu0 0.0
    %423 = vmatpush1.msra.mxu0 0.0
    %424 = vmatprep.subr.mxu0 0.0
    %425 = vmatpush1.msra.mxu0 0.0
    %426 = vmatprep.subr.mxu0 0.0
    %427 = vmatpush1.msra.mxu0 0.0
    %428 = vmatprep.subr.mxu0 0.0
    %429 = vmatpush1.msra.mxu0 0.0
    %430 = vmatprep.subr.mxu0 0.0
    %431 = vmatpush1.msra.mxu0 0.0
    %432 = vmatprep.subr.mxu0 0.0
    %433 = vmatpush1.msra.mxu0 0.0
    %434 = vmatprep.subr.mxu0 0.0
    %435 = vmatpush1.msra.mxu0 0.0
    %436 = vmatprep.subr.mxu0 0.0
    %437 = vmatpush1.msra.mxu0 0.0
    %438 = vmatprep.subr.mxu0 0.0
    %439 = vmatpush1.msra.mxu0 0.0
    %440 = vmatprep.subr.mxu0 0.0
    %441 = vmatpush1.msra.mxu0 0.0
    %442 = vmatprep.mubr.f32.mxu0 0.0
    %443 = vmatmul.mubr.f32.gmra.mrb[0].mxu0 %v376
    %v444 = vpop.f32.mrb[0].mxu0
    %v445 = vadd.f32 0.0, %v444
    %v446 = vpop.f32.mrb[0].mxu0
    %447 = vdwg.mxu0
    %448 = vrot.lane.b32.xlu0 %v191, 64
    %v449 = vpop.permute.xlu0 %448
    %v452 = vsel %vm198, %v371, 0
    %454 = vmatprep.subr.mxu0 0.0
    %455 = vmatpush1.msra.mxu0 %v449
    %456 = vmatprep.subr.mxu0 0.0
    %457 = vmatpush1.msra.mxu0 0.0
    %458 = vmatprep.subr.mxu0 0.0
    %459 = vmatpush1.msra.mxu0 0.0
    %460 = vmatprep.subr.mxu0 0.0
    %461 = vmatpush1.msra.mxu0 0.0
    %462 = vmatprep.subr.mxu0 0.0
    %463 = vmatpush1.msra.mxu0 0.0
    %464 = vmatprep.subr.mxu0 0.0
    %465 = vmatpush1.msra.mxu0 0.0
    %466 = vmatprep.subr.mxu0 0.0
    %467 = vmatpush1.msra.mxu0 0.0
    %468 = vmatprep.subr.mxu0 0.0
    %469 = vmatpush1.msra.mxu0 0.0
    %470 = vmatprep.subr.mxu0 0.0
    %471 = vmatpush1.msra.mxu0 0.0
    %472 = vmatprep.subr.mxu0 0.0
    %473 = vmatpush1.msra.mxu0 0.0
    %474 = vmatprep.subr.mxu0 0.0
    %475 = vmatpush1.msra.mxu0 0.0
    %476 = vmatprep.subr.mxu0 0.0
    %477 = vmatpush1.msra.mxu0 0.0
    %478 = vmatprep.subr.mxu0 0.0
    %479 = vmatpush1.msra.mxu0 0.0
    %480 = vmatprep.subr.mxu0 0.0
    %481 = vmatpush1.msra.mxu0 0.0
    %482 = vmatprep.subr.mxu0 0.0
    %483 = vmatpush1.msra.mxu0 0.0
    %484 = vmatprep.subr.mxu0 0.0
    %485 = vmatpush1.msra.mxu0 0.0
    %486 = vmatprep.subr.mxu0 0.0
    %487 = vmatpush1.msra.mxu0 0.0
    %488 = vmatprep.subr.mxu0 0.0
    %489 = vmatpush1.msra.mxu0 0.0
    %490 = vmatprep.subr.mxu0 0.0
    %491 = vmatpush1.msra.mxu0 0.0
    %492 = vmatprep.subr.mxu0 0.0
    %493 = vmatpush1.msra.mxu0 0.0
    %494 = vmatprep.subr.mxu0 0.0
    %495 = vmatpush1.msra.mxu0 0.0
    %496 = vmatprep.subr.mxu0 0.0
    %497 = vmatpush1.msra.mxu0 0.0
    %498 = vmatprep.subr.mxu0 0.0
    %499 = vmatpush1.msra.mxu0 0.0
    %500 = vmatprep.subr.mxu0 0.0
    %501 = vmatpush1.msra.mxu0 0.0
    %502 = vmatprep.subr.mxu0 0.0
    %503 = vmatpush1.msra.mxu0 0.0
    %504 = vmatprep.subr.mxu0 0.0
    %505 = vmatpush1.msra.mxu0 0.0
    %506 = vmatprep.subr.mxu0 0.0
    %507 = vmatpush1.msra.mxu0 0.0
    %508 = vmatprep.subr.mxu0 0.0
    %509 = vmatpush1.msra.mxu0 0.0
    %510 = vmatprep.subr.mxu0 0.0
    %511 = vmatpush1.msra.mxu0 0.0
    %512 = vmatprep.subr.mxu0 0.0
    %513 = vmatpush1.msra.mxu0 0.0
    %514 = vmatprep.subr.mxu0 0.0
    %515 = vmatpush1.msra.mxu0 0.0
    %516 = vmatprep.subr.mxu0 0.0
    %517 = vmatpush1.msra.mxu0 0.0
    %518 = vmatprep.mubr.f32.mxu0 0.0
    %519 = vmatmul.mubr.f32.gmra.mrb[0].mxu0 %v452
    %v520 = vpop.f32.mrb[0].mxu0
    %v521 = vadd.f32 0.0, %v520
    %v522 = vpop.f32.mrb[0].mxu0
    %523 = vdwg.mxu0
    %524 = vrot.lane.b32.xlu0 %v186, 120
    %v525 = vpop.permute.xlu0 %524
    %526 = vrot.lane.b32.xlu0 %v186, 88
    %v527 = vpop.permute.xlu0 %526
    %v528 = vsel %vm198, %v525, 0
    %v530 = vsel %vm198, %v527, 0
    %532 = vmatprep.subr.mxu0 0.0
    %533 = vmatpush1.xpose.msra.mxu0 %v530
    %534 = vmatprep.subr.mxu0 0.0
    %535 = vmatpush1.xpose.msra.mxu0 0.0
    %536 = vmatprep.subr.mxu0 0.0
    %537 = vmatpush1.xpose.msra.mxu0 0.0
    %538 = vmatprep.subr.mxu0 0.0
    %539 = vmatpush1.xpose.msra.mxu0 0.0
    %540 = vmatprep.subr.mxu0 0.0
    %541 = vmatpush1.xpose.msra.mxu0 0.0
    %542 = vmatprep.subr.mxu0 0.0
    %543 = vmatpush1.xpose.msra.mxu0 0.0
    %544 = vmatprep.subr.mxu0 0.0
    %545 = vmatpush1.xpose.msra.mxu0 0.0
    %546 = vmatprep.subr.mxu0 0.0
    %547 = vmatpush1.xpose.msra.mxu0 0.0
    %548 = vmatprep.subr.mxu0 0.0
    %549 = vmatpush1.xpose.msra.mxu0 0.0
    %550 = vmatprep.subr.mxu0 0.0
    %551 = vmatpush1.xpose.msra.mxu0 0.0
    %552 = vmatprep.subr.mxu0 0.0
    %553 = vmatpush1.xpose.msra.mxu0 0.0
    %554 = vmatprep.subr.mxu0 0.0
    %555 = vmatpush1.xpose.msra.mxu0 0.0
    %556 = vmatprep.subr.mxu0 0.0
    %557 = vmatpush1.xpose.msra.mxu0 0.0
    %558 = vmatprep.subr.mxu0 0.0
    %559 = vmatpush1.xpose.msra.mxu0 0.0
    %560 = vmatprep.subr.mxu0 0.0
    %561 = vmatpush1.xpose.msra.mxu0 0.0
    %562 = vmatprep.subr.mxu0 0.0
    %563 = vmatpush1.xpose.msra.mxu0 0.0
    %564 = vmatprep.subr.mxu0 0.0
    %565 = vmatpush1.xpose.msra.mxu0 0.0
    %566 = vmatprep.subr.mxu0 0.0
    %567 = vmatpush1.xpose.msra.mxu0 0.0
    %568 = vmatprep.subr.mxu0 0.0
    %569 = vmatpush1.xpose.msra.mxu0 0.0
    %570 = vmatprep.subr.mxu0 0.0
    %571 = vmatpush1.xpose.msra.mxu0 0.0
    %572 = vmatprep.subr.mxu0 0.0
    %573 = vmatpush1.xpose.msra.mxu0 0.0
    %574 = vmatprep.subr.mxu0 0.0
    %575 = vmatpush1.xpose.msra.mxu0 0.0
    %576 = vmatprep.subr.mxu0 0.0
    %577 = vmatpush1.xpose.msra.mxu0 0.0
    %578 = vmatprep.subr.mxu0 0.0
    %579 = vmatpush1.xpose.msra.mxu0 0.0
    %580 = vmatprep.subr.mxu0 0.0
    %581 = vmatpush1.xpose.msra.mxu0 0.0
    %582 = vmatprep.subr.mxu0 0.0
    %583 = vmatpush1.xpose.msra.mxu0 0.0
    %584 = vmatprep.subr.mxu0 0.0
    %585 = vmatpush1.xpose.msra.mxu0 0.0
    %586 = vmatprep.subr.mxu0 0.0
    %587 = vmatpush1.xpose.msra.mxu0 0.0
    %588 = vmatprep.subr.mxu0 0.0
    %589 = vmatpush1.xpose.msra.mxu0 0.0
    %590 = vmatprep.subr.mxu0 0.0
    %591 = vmatpush1.xpose.msra.mxu0 0.0
    %592 = vmatprep.subr.mxu0 0.0
    %593 = vmatpush1.xpose.msra.mxu0 0.0
    %594 = vmatprep.subr.mxu0 0.0
    %595 = vmatpush1.xpose.msra.mxu0 0.0
    %596 = vmatprep.mubr.f32.mxu0 0.0
    %597 = vmatmul.mubr.f32.gmra.mrb[0].mxu0 %v528
    %v598 = vpop.f32.mrb[0].mxu0
    %v599 = vadd.f32 %v194, %v598
    %v600 = vpop.f32.mrb[0].mxu0
    %601 = vdwg.mxu0
    %602 = vrot.lane.b32.xlu0 %v191, 120
    %v603 = vpop.permute.xlu0 %602
    %604 = vrot.lane.b32.xlu0 %v191, 88
    %v605 = vpop.permute.xlu0 %604
    %v606 = vsel %vm198, %v603, 0
    %v608 = vsel %vm198, %v605, 0
    %610 = vmatprep.subr.mxu0 0.0
    %611 = vmatpush1.xpose.msra.mxu0 %v608
    %612 = vmatprep.subr.mxu0 0.0
    %613 = vmatpush1.xpose.msra.mxu0 0.0
    %614 = vmatprep.subr.mxu0 0.0
    %615 = vmatpush1.xpose.msra.mxu0 0.0
    %616 = vmatprep.subr.mxu0 0.0
    %617 = vmatpush1.xpose.msra.mxu0 0.0
    %618 = vmatprep.subr.mxu0 0.0
    %619 = vmatpush1.xpose.msra.mxu0 0.0
    %620 = vmatprep.subr.mxu0 0.0
    %621 = vmatpush1.xpose.msra.mxu0 0.0
    %622 = vmatprep.subr.mxu0 0.0
    %623 = vmatpush1.xpose.msra.mxu0 0.0
    %624 = vmatprep.subr.mxu0 0.0
    %625 = vmatpush1.xpose.msra.mxu0 0.0
    %626 = vmatprep.subr.mxu0 0.0
    %627 = vmatpush1.xpose.msra.mxu0 0.0
    %628 = vmatprep.subr.mxu0 0.0
    %629 = vmatpush1.xpose.msra.mxu0 0.0
    %630 = vmatprep.subr.mxu0 0.0
    %631 = vmatpush1.xpose.msra.mxu0 0.0
    %632 = vmatprep.subr.mxu0 0.0
    %633 = vmatpush1.xpose.msra.mxu0 0.0
    %634 = vmatprep.subr.mxu0 0.0
    %635 = vmatpush1.xpose.msra.mxu0 0.0
    %636 = vmatprep.subr.mxu0 0.0
    %637 = vmatpush1.xpose.msra.mxu0 0.0
    %638 = vmatprep.subr.mxu0 0.0
    %639 = vmatpush1.xpose.msra.mxu0 0.0
    %640 = vmatprep.subr.mxu0 0.0
    %641 = vmatpush1.xpose.msra.mxu0 0.0
    %642 = vmatprep.subr.mxu0 0.0
    %643 = vmatpush1.xpose.msra.mxu0 0.0
    %644 = vmatprep.subr.mxu0 0.0
    %645 = vmatpush1.xpose.msra.mxu0 0.0
    %646 = vmatprep.subr.mxu0 0.0
    %647 = vmatpush1.xpose.msra.mxu0 0.0
    %648 = vmatprep.subr.mxu0 0.0
    %649 = vmatpush1.xpose.msra.mxu0 0.0
    %650 = vmatprep.subr.mxu0 0.0
    %651 = vmatpush1.xpose.msra.mxu0 0.0
    %652 = vmatprep.subr.mxu0 0.0
    %653 = vmatpush1.xpose.msra.mxu0 0.0
    %654 = vmatprep.subr.mxu0 0.0
    %655 = vmatpush1.xpose.msra.mxu0 0.0
    %656 = vmatprep.subr.mxu0 0.0
    %657 = vmatpush1.xpose.msra.mxu0 0.0
    %658 = vmatprep.subr.mxu0 0.0
    %659 = vmatpush1.xpose.msra.mxu0 0.0
    %660 = vmatprep.subr.mxu0 0.0
    %661 = vmatpush1.xpose.msra.mxu0 0.0
    %662 = vmatprep.subr.mxu0 0.0
    %663 = vmatpush1.xpose.msra.mxu0 0.0
    %664 = vmatprep.subr.mxu0 0.0
    %665 = vmatpush1.xpose.msra.mxu0 0.0
    %666 = vmatprep.subr.mxu0 0.0
    %667 = vmatpush1.xpose.msra.mxu0 0.0
    %668 = vmatprep.subr.mxu0 0.0
    %669 = vmatpush1.xpose.msra.mxu0 0.0
    %670 = vmatprep.subr.mxu0 0.0
    %671 = vmatpush1.xpose.msra.mxu0 0.0
    %672 = vmatprep.subr.mxu0 0.0
    %673 = vmatpush1.xpose.msra.mxu0 0.0
    %674 = vmatprep.mubr.f32.mxu0 0.0
    %675 = vmatmul.mubr.f32.gmra.mrb[0].mxu0 %v606
    %v676 = vpop.f32.mrb[0].mxu0
    %v677 = vadd.f32 %v194, %v676
    %v678 = vpop.f32.mrb[0].mxu0
    %679 = vdwg.mxu0
    %v680 = vsel %vm198, %v599, -inf
    %681 = vmax.xlane.f32.xlu0 %v680
    %v682 = vpop.xlane.xlu0 %681
    %v683 = vsel %vm198, %v677, -inf
    %684 = vmax.xlane.f32.xlu0 %v683
    %v685 = vpop.xlane.xlu0 %684
    %v686 = vsub.f32 %v599, %v682
    %v687 = vsub.f32 %v677, %v685
    %v688 = vmul.f32 %v686, 1.442695
    %v689 = vpow.pop %v688
    %v690 = vmul.f32 %v687, 1.442695
    %v691 = vpow.pop %v690
    %v692 = vsel %vm198, %v689, 0.0
    %693 = vadd.xlane.f32.xlu0 %v692
    %v694 = vpop.xlane.xlu0 %693
    %v695 = vsel %vm198, %v691, 0.0
    %696 = vadd.xlane.f32.xlu0 %v695
    %v697 = vpop.xlane.xlu0 %696
    %v698 = vrcp.pop %v694
    %v699 = vrcp.pop %v697
    %v700 = vmul.f32 %v689, %v698
    %v701 = vmul.f32 %v691, %v699
    %702 = vrot.lane.b32.xlu0 %v186, 56
    %v703 = vpop.permute.xlu0 %702
    %v706 = vsel %vm198, %v700, 0
    %708 = vmatprep.subr.mxu0 0.0
    %709 = vmatpush1.msra.mxu0 %v703
    %710 = vmatprep.subr.mxu0 0.0
    %711 = vmatpush1.msra.mxu0 0.0
    %712 = vmatprep.subr.mxu0 0.0
    %713 = vmatpush1.msra.mxu0 0.0
    %714 = vmatprep.subr.mxu0 0.0
    %715 = vmatpush1.msra.mxu0 0.0
    %716 = vmatprep.subr.mxu0 0.0
    %717 = vmatpush1.msra.mxu0 0.0
    %718 = vmatprep.subr.mxu0 0.0
    %719 = vmatpush1.msra.mxu0 0.0
    %720 = vmatprep.subr.mxu0 0.0
    %721 = vmatpush1.msra.mxu0 0.0
    %722 = vmatprep.subr.mxu0 0.0
    %723 = vmatpush1.msra.mxu0 0.0
    %724 = vmatprep.subr.mxu0 0.0
    %725 = vmatpush1.msra.mxu0 0.0
    %726 = vmatprep.subr.mxu0 0.0
    %727 = vmatpush1.msra.mxu0 0.0
    %728 = vmatprep.subr.mxu0 0.0
    %729 = vmatpush1.msra.mxu0 0.0
    %730 = vmatprep.subr.mxu0 0.0
    %731 = vmatpush1.msra.mxu0 0.0
    %732 = vmatprep.subr.mxu0 0.0
    %733 = vmatpush1.msra.mxu0 0.0
    %734 = vmatprep.subr.mxu0 0.0
    %735 = vmatpush1.msra.mxu0 0.0
    %736 = vmatprep.subr.mxu0 0.0
    %737 = vmatpush1.msra.mxu0 0.0
    %738 = vmatprep.subr.mxu0 0.0
    %739 = vmatpush1.msra.mxu0 0.0
    %740 = vmatprep.subr.mxu0 0.0
    %741 = vmatpush1.msra.mxu0 0.0
    %742 = vmatprep.subr.mxu0 0.0
    %743 = vmatpush1.msra.mxu0 0.0
    %744 = vmatprep.subr.mxu0 0.0
    %745 = vmatpush1.msra.mxu0 0.0
    %746 = vmatprep.subr.mxu0 0.0
    %747 = vmatpush1.msra.mxu0 0.0
    %748 = vmatprep.subr.mxu0 0.0
    %749 = vmatpush1.msra.mxu0 0.0
    %750 = vmatprep.subr.mxu0 0.0
    %751 = vmatpush1.msra.mxu0 0.0
    %752 = vmatprep.subr.mxu0 0.0
    %753 = vmatpush1.msra.mxu0 0.0
    %754 = vmatprep.subr.mxu0 0.0
    %755 = vmatpush1.msra.mxu0 0.0
    %756 = vmatprep.subr.mxu0 0.0
    %757 = vmatpush1.msra.mxu0 0.0
    %758 = vmatprep.subr.mxu0 0.0
    %759 = vmatpush1.msra.mxu0 0.0
    %760 = vmatprep.subr.mxu0 0.0
    %761 = vmatpush1.msra.mxu0 0.0
    %762 = vmatprep.subr.mxu0 0.0
    %763 = vmatpush1.msra.mxu0 0.0
    %764 = vmatprep.subr.mxu0 0.0
    %765 = vmatpush1.msra.mxu0 0.0
    %766 = vmatprep.subr.mxu0 0.0
    %767 = vmatpush1.msra.mxu0 0.0
    %768 = vmatprep.subr.mxu0 0.0
    %769 = vmatpush1.msra.mxu0 0.0
    %770 = vmatprep.subr.mxu0 0.0
    %771 = vmatpush1.msra.mxu0 0.0
    %772 = vmatprep.mubr.f32.mxu0 0.0
    %773 = vmatmul.mubr.f32.gmra.mrb[0].mxu0 %v706
    %v774 = vpop.f32.mrb[0].mxu0
    %v775 = vadd.f32 0.0, %v774
    %v776 = vpop.f32.mrb[0].mxu0
    %777 = vdwg.mxu0
    %778 = vrot.lane.b32.xlu0 %v191, 56
    %v779 = vpop.permute.xlu0 %778
    %v782 = vsel %vm198, %v701, 0
    %784 = vmatprep.subr.mxu0 0.0
    %785 = vmatpush1.msra.mxu0 %v779
    %786 = vmatprep.subr.mxu0 0.0
    %787 = vmatpush1.msra.mxu0 0.0
    %788 = vmatprep.subr.mxu0 0.0
    %789 = vmatpush1.msra.mxu0 0.0
    %790 = vmatprep.subr.mxu0 0.0
    %791 = vmatpush1.msra.mxu0 0.0
    %792 = vmatprep.subr.mxu0 0.0
    %793 = vmatpush1.msra.mxu0 0.0
    %794 = vmatprep.subr.mxu0 0.0
    %795 = vmatpush1.msra.mxu0 0.0
    %796 = vmatprep.subr.mxu0 0.0
    %797 = vmatpush1.msra.mxu0 0.0
    %798 = vmatprep.subr.mxu0 0.0
    %799 = vmatpush1.msra.mxu0 0.0
    %800 = vmatprep.subr.mxu0 0.0
    %801 = vmatpush1.msra.mxu0 0.0
    %802 = vmatprep.subr.mxu0 0.0
    %803 = vmatpush1.msra.mxu0 0.0
    %804 = vmatprep.subr.mxu0 0.0
    %805 = vmatpush1.msra.mxu0 0.0
    %806 = vmatprep.subr.mxu0 0.0
    %807 = vmatpush1.msra.mxu0 0.0
    %808 = vmatprep.subr.mxu0 0.0
    %809 = vmatpush1.msra.mxu0 0.0
    %810 = vmatprep.subr.mxu0 0.0
    %811 = vmatpush1.msra.mxu0 0.0
    %812 = vmatprep.subr.mxu0 0.0
    %813 = vmatpush1.msra.mxu0 0.0
    %814 = vmatprep.subr.mxu0 0.0
    %815 = vmatpush1.msra.mxu0 0.0
    %816 = vmatprep.subr.mxu0 0.0
    %817 = vmatpush1.msra.mxu0 0.0
    %818 = vmatprep.subr.mxu0 0.0
    %819 = vmatpush1.msra.mxu0 0.0
    %820 = vmatprep.subr.mxu0 0.0
    %821 = vmatpush1.msra.mxu0 0.0
    %822 = vmatprep.subr.mxu0 0.0
    %823 = vmatpush1.msra.mxu0 0.0
    %824 = vmatprep.subr.mxu0 0.0
    %825 = vmatpush1.msra.mxu0 0.0
    %826 = vmatprep.subr.mxu0 0.0
    %827 = vmatpush1.msra.mxu0 0.0
    %828 = vmatprep.subr.mxu0 0.0
    %829 = vmatpush1.msra.mxu0 0.0
    %830 = vmatprep.subr.mxu0 0.0
    %831 = vmatpush1.msra.mxu0 0.0
    %832 = vmatprep.subr.mxu0 0.0
    %833 = vmatpush1.msra.mxu0 0.0
    %834 = vmatprep.subr.mxu0 0.0
    %835 = vmatpush1.msra.mxu0 0.0
    %836 = vmatprep.subr.mxu0 0.0
    %837 = vmatpush1.msra.mxu0 0.0
    %838 = vmatprep.subr.mxu0 0.0
    %839 = vmatpush1.msra.mxu0 0.0
    %840 = vmatprep.subr.mxu0 0.0
    %841 = vmatpush1.msra.mxu0 0.0
    %842 = vmatprep.subr.mxu0 0.0
    %843 = vmatpush1.msra.mxu0 0.0
    %844 = vmatprep.subr.mxu0 0.0
    %845 = vmatpush1.msra.mxu0 0.0
    %846 = vmatprep.subr.mxu0 0.0
    %847 = vmatpush1.msra.mxu0 0.0
    %848 = vmatprep.mubr.f32.mxu0 0.0
    %849 = vmatmul.mubr.f32.gmra.mrb[0].mxu0 %v782
    %v850 = vpop.f32.mrb[0].mxu0
    %v851 = vadd.f32 0.0, %v850
    %v852 = vpop.f32.mrb[0].mxu0
    %853 = vdwg.mxu0
    %854 = vrot.lane.b32.xlu0 %v186, 112
    %v855 = vpop.permute.xlu0 %854
    %856 = vrot.lane.b32.xlu0 %v186, 80
    %v857 = vpop.permute.xlu0 %856
    %v858 = vsel %vm198, %v855, 0
    %v860 = vsel %vm198, %v857, 0
    %862 = vmatprep.subr.mxu0 0.0
    %863 = vmatpush1.xpose.msra.mxu0 %v860
    %864 = vmatprep.subr.mxu0 0.0
    %865 = vmatpush1.xpose.msra.mxu0 0.0
    %866 = vmatprep.subr.mxu0 0.0
    %867 = vmatpush1.xpose.msra.mxu0 0.0
    %868 = vmatprep.subr.mxu0 0.0
    %869 = vmatpush1.xpose.msra.mxu0 0.0
    %870 = vmatprep.subr.mxu0 0.0
    %871 = vmatpush1.xpose.msra.mxu0 0.0
    %872 = vmatprep.subr.mxu0 0.0
    %873 = vmatpush1.xpose.msra.mxu0 0.0
    %874 = vmatprep.subr.mxu0 0.0
    %875 = vmatpush1.xpose.msra.mxu0 0.0
    %876 = vmatprep.subr.mxu0 0.0
    %877 = vmatpush1.xpose.msra.mxu0 0.0
    %878 = vmatprep.subr.mxu0 0.0
    %879 = vmatpush1.xpose.msra.mxu0 0.0
    %880 = vmatprep.subr.mxu0 0.0
    %881 = vmatpush1.xpose.msra.mxu0 0.0
    %882 = vmatprep.subr.mxu0 0.0
    %883 = vmatpush1.xpose.msra.mxu0 0.0
    %884 = vmatprep.subr.mxu0 0.0
    %885 = vmatpush1.xpose.msra.mxu0 0.0
    %886 = vmatprep.subr.mxu0 0.0
    %887 = vmatpush1.xpose.msra.mxu0 0.0
    %888 = vmatprep.subr.mxu0 0.0
    %889 = vmatpush1.xpose.msra.mxu0 0.0
    %890 = vmatprep.subr.mxu0 0.0
    %891 = vmatpush1.xpose.msra.mxu0 0.0
    %892 = vmatprep.subr.mxu0 0.0
    %893 = vmatpush1.xpose.msra.mxu0 0.0
    %894 = vmatprep.subr.mxu0 0.0
    %895 = vmatpush1.xpose.msra.mxu0 0.0
    %896 = vmatprep.subr.mxu0 0.0
    %897 = vmatpush1.xpose.msra.mxu0 0.0
    %898 = vmatprep.subr.mxu0 0.0
    %899 = vmatpush1.xpose.msra.mxu0 0.0
    %900 = vmatprep.subr.mxu0 0.0
    %901 = vmatpush1.xpose.msra.mxu0 0.0
    %902 = vmatprep.subr.mxu0 0.0
    %903 = vmatpush1.xpose.msra.mxu0 0.0
    %904 = vmatprep.subr.mxu0 0.0
    %905 = vmatpush1.xpose.msra.mxu0 0.0
    %906 = vmatprep.subr.mxu0 0.0
    %907 = vmatpush1.xpose.msra.mxu0 0.0
    %908 = vmatprep.subr.mxu0 0.0
    %909 = vmatpush1.xpose.msra.mxu0 0.0
    %910 = vmatprep.subr.mxu0 0.0
    %911 = vmatpush1.xpose.msra.mxu0 0.0
    %912 = vmatprep.subr.mxu0 0.0
    %913 = vmatpush1.xpose.msra.mxu0 0.0
    %914 = vmatprep.subr.mxu0 0.0
    %915 = vmatpush1.xpose.msra.mxu0 0.0
    %916 = vmatprep.subr.mxu0 0.0
    %917 = vmatpush1.xpose.msra.mxu0 0.0
    %918 = vmatprep.subr.mxu0 0.0
    %919 = vmatpush1.xpose.msra.mxu0 0.0
    %920 = vmatprep.subr.mxu0 0.0
    %921 = vmatpush1.xpose.msra.mxu0 0.0
    %922 = vmatprep.subr.mxu0 0.0
    %923 = vmatpush1.xpose.msra.mxu0 0.0
    %924 = vmatprep.subr.mxu0 0.0
    %925 = vmatpush1.xpose.msra.mxu0 0.0
    %926 = vmatprep.mubr.f32.mxu0 0.0
    %927 = vmatmul.mubr.f32.gmra.mrb[0].mxu0 %v858
    %v928 = vpop.f32.mrb[0].mxu0
    %v929 = vadd.f32 %v194, %v928
    %v930 = vpop.f32.mrb[0].mxu0
    %931 = vdwg.mxu0
    %932 = vrot.lane.b32.xlu0 %v191, 112
    %v933 = vpop.permute.xlu0 %932
    %934 = vrot.lane.b32.xlu0 %v191, 80
    %v935 = vpop.permute.xlu0 %934
    %v936 = vsel %vm198, %v933, 0
    %v938 = vsel %vm198, %v935, 0
    %940 = vmatprep.subr.mxu0 0.0
    %941 = vmatpush1.xpose.msra.mxu0 %v938
    %942 = vmatprep.subr.mxu0 0.0
    %943 = vmatpush1.xpose.msra.mxu0 0.0
    %944 = vmatprep.subr.mxu0 0.0
    %945 = vmatpush1.xpose.msra.mxu0 0.0
    %946 = vmatprep.subr.mxu0 0.0
    %947 = vmatpush1.xpose.msra.mxu0 0.0
    %948 = vmatprep.subr.mxu0 0.0
    %949 = vmatpush1.xpose.msra.mxu0 0.0
    %950 = vmatprep.subr.mxu0 0.0
    %951 = vmatpush1.xpose.msra.mxu0 0.0
    %952 = vmatprep.subr.mxu0 0.0
    %953 = vmatpush1.xpose.msra.mxu0 0.0
    %954 = vmatprep.subr.mxu0 0.0
    %955 = vmatpush1.xpose.msra.mxu0 0.0
    %956 = vmatprep.subr.mxu0 0.0
    %957 = vmatpush1.xpose.msra.mxu0 0.0
    %958 = vmatprep.subr.mxu0 0.0
    %959 = vmatpush1.xpose.msra.mxu0 0.0
    %960 = vmatprep.subr.mxu0 0.0
    %961 = vmatpush1.xpose.msra.mxu0 0.0
    %962 = vmatprep.subr.mxu0 0.0
    %963 = vmatpush1.xpose.msra.mxu0 0.0
    %964 = vmatprep.subr.mxu0 0.0
    %965 = vmatpush1.xpose.msra.mxu0 0.0
    %966 = vmatprep.subr.mxu0 0.0
    %967 = vmatpush1.xpose.msra.mxu0 0.0
    %968 = vmatprep.subr.mxu0 0.0
    %969 = vmatpush1.xpose.msra.mxu0 0.0
    %970 = vmatprep.subr.mxu0 0.0
    %971 = vmatpush1.xpose.msra.mxu0 0.0
    %972 = vmatprep.subr.mxu0 0.0
    %973 = vmatpush1.xpose.msra.mxu0 0.0
    %974 = vmatprep.subr.mxu0 0.0
    %975 = vmatpush1.xpose.msra.mxu0 0.0
    %976 = vmatprep.subr.mxu0 0.0
    %977 = vmatpush1.xpose.msra.mxu0 0.0
    %978 = vmatprep.subr.mxu0 0.0
    %979 = vmatpush1.xpose.msra.mxu0 0.0
    %980 = vmatprep.subr.mxu0 0.0
    %981 = vmatpush1.xpose.msra.mxu0 0.0
    %982 = vmatprep.subr.mxu0 0.0
    %983 = vmatpush1.xpose.msra.mxu0 0.0
    %984 = vmatprep.subr.mxu0 0.0
    %985 = vmatpush1.xpose.msra.mxu0 0.0
    %986 = vmatprep.subr.mxu0 0.0
    %987 = vmatpush1.xpose.msra.mxu0 0.0
    %988 = vmatprep.subr.mxu0 0.0
    %989 = vmatpush1.xpose.msra.mxu0 0.0
    %990 = vmatprep.subr.mxu0 0.0
    %991 = vmatpush1.xpose.msra.mxu0 0.0
    %992 = vmatprep.subr.mxu0 0.0
    %993 = vmatpush1.xpose.msra.mxu0 0.0
    %994 = vmatprep.subr.mxu0 0.0
    %995 = vmatpush1.xpose.msra.mxu0 0.0
    %996 = vmatprep.subr.mxu0 0.0
    %997 = vmatpush1.xpose.msra.mxu0 0.0
    %998 = vmatprep.subr.mxu0 0.0
    %999 = vmatpush1.xpose.msra.mxu0 0.0
    %1000 = vmatprep.subr.mxu0 0.0
    %1001 = vmatpush1.xpose.msra.mxu0 0.0
    %1002 = vmatprep.subr.mxu0 0.0
    %1003 = vmatpush1.xpose.msra.mxu0 0.0
    %1004 = vmatprep.mubr.f32.mxu0 0.0
    %1005 = vmatmul.mubr.f32.gmra.mrb[0].mxu0 %v936
    %v1006 = vpop.f32.mrb[0].mxu0
    %v1007 = vadd.f32 %v194, %v1006
    %v1008 = vpop.f32.mrb[0].mxu0
    %1009 = vdwg.mxu0
    %v1010 = vsel %vm198, %v929, -inf
    %1011 = vmax.xlane.f32.xlu0 %v1010
    %v1012 = vpop.xlane.xlu0 %1011
    %v1013 = vsel %vm198, %v1007, -inf
    %1014 = vmax.xlane.f32.xlu0 %v1013
    %v1015 = vpop.xlane.xlu0 %1014
    %v1016 = vsub.f32 %v929, %v1012
    %v1017 = vsub.f32 %v1007, %v1015
    %v1018 = vmul.f32 %v1016, 1.442695
    %v1019 = vpow.pop %v1018
    %v1020 = vmul.f32 %v1017, 1.442695
    %v1021 = vpow.pop %v1020
    %v1022 = vsel %vm198, %v1019, 0.0
    %1023 = vadd.xlane.f32.xlu0 %v1022
    %v1024 = vpop.xlane.xlu0 %1023
    %v1025 = vsel %vm198, %v1021, 0.0
    %1026 = vadd.xlane.f32.xlu0 %v1025
    %v1027 = vpop.xlane.xlu0 %1026
    %v1028 = vrcp.pop %v1024
    %v1029 = vrcp.pop %v1027
    %v1030 = vmul.f32 %v1019, %v1028
    %v1031 = vmul.f32 %v1021, %v1029
    %1032 = vrot.lane.b32.xlu0 %v186, 48
    %v1033 = vpop.permute.xlu0 %1032
    %v1036 = vsel %vm198, %v1030, 0
    %1038 = vmatprep.subr.mxu0 0.0
    %1039 = vmatpush1.msra.mxu0 %v1033
    %1040 = vmatprep.subr.mxu0 0.0
    %1041 = vmatpush1.msra.mxu0 0.0
    %1042 = vmatprep.subr.mxu0 0.0
    %1043 = vmatpush1.msra.mxu0 0.0
    %1044 = vmatprep.subr.mxu0 0.0
    %1045 = vmatpush1.msra.mxu0 0.0
    %1046 = vmatprep.subr.mxu0 0.0
    %1047 = vmatpush1.msra.mxu0 0.0
    %1048 = vmatprep.subr.mxu0 0.0
    %1049 = vmatpush1.msra.mxu0 0.0
    %1050 = vmatprep.subr.mxu0 0.0
    %1051 = vmatpush1.msra.mxu0 0.0
    %1052 = vmatprep.subr.mxu0 0.0
    %1053 = vmatpush1.msra.mxu0 0.0
    %1054 = vmatprep.subr.mxu0 0.0
    %1055 = vmatpush1.msra.mxu0 0.0
    %1056 = vmatprep.subr.mxu0 0.0
    %1057 = vmatpush1.msra.mxu0 0.0
    %1058 = vmatprep.subr.mxu0 0.0
    %1059 = vmatpush1.msra.mxu0 0.0
    %1060 = vmatprep.subr.mxu0 0.0
    %1061 = vmatpush1.msra.mxu0 0.0
    %1062 = vmatprep.subr.mxu0 0.0
    %1063 = vmatpush1.msra.mxu0 0.0
    %1064 = vmatprep.subr.mxu0 0.0
    %1065 = vmatpush1.msra.mxu0 0.0
    %1066 = vmatprep.subr.mxu0 0.0
    %1067 = vmatpush1.msra.mxu0 0.0
    %1068 = vmatprep.subr.mxu0 0.0
    %1069 = vmatpush1.msra.mxu0 0.0
    %1070 = vmatprep.subr.mxu0 0.0
    %1071 = vmatpush1.msra.mxu0 0.0
    %1072 = vmatprep.subr.mxu0 0.0
    %1073 = vmatpush1.msra.mxu0 0.0
    %1074 = vmatprep.subr.mxu0 0.0
    %1075 = vmatpush1.msra.mxu0 0.0
    %1076 = vmatprep.subr.mxu0 0.0
    %1077 = vmatpush1.msra.mxu0 0.0
    %1078 = vmatprep.subr.mxu0 0.0
    %1079 = vmatpush1.msra.mxu0 0.0
    %1080 = vmatprep.subr.mxu0 0.0
    %1081 = vmatpush1.msra.mxu0 0.0
    %1082 = vmatprep.subr.mxu0 0.0
    %1083 = vmatpush1.msra.mxu0 0.0
    %1084 = vmatprep.subr.mxu0 0.0
    %1085 = vmatpush1.msra.mxu0 0.0
    %1086 = vmatprep.subr.mxu0 0.0
    %1087 = vmatpush1.msra.mxu0 0.0
    %1088 = vmatprep.subr.mxu0 0.0
    %1089 = vmatpush1.msra.mxu0 0.0
    %1090 = vmatprep.subr.mxu0 0.0
    %1091 = vmatpush1.msra.mxu0 0.0
    %1092 = vmatprep.subr.mxu0 0.0
    %1093 = vmatpush1.msra.mxu0 0.0
    %1094 = vmatprep.subr.mxu0 0.0
    %1095 = vmatpush1.msra.mxu0 0.0
    %1096 = vmatprep.subr.mxu0 0.0
    %1097 = vmatpush1.msra.mxu0 0.0
    %1098 = vmatprep.subr.mxu0 0.0
    %1099 = vmatpush1.msra.mxu0 0.0
    %1100 = vmatprep.subr.mxu0 0.0
    %1101 = vmatpush1.msra.mxu0 0.0
    %1102 = vmatprep.mubr.f32.mxu0 0.0
    %1103 = vmatmul.mubr.f32.gmra.mrb[0].mxu0 %v1036
    %v1104 = vpop.f32.mrb[0].mxu0
    %v1105 = vadd.f32 0.0, %v1104
    %v1106 = vpop.f32.mrb[0].mxu0
    %1107 = vdwg.mxu0
    %1108 = vrot.lane.b32.xlu0 %v191, 48
    %v1109 = vpop.permute.xlu0 %1108
    %v1112 = vsel %vm198, %v1031, 0
    %1114 = vmatprep.subr.mxu0 0.0
    %1115 = vmatpush1.msra.mxu0 %v1109
    %1116 = vmatprep.subr.mxu0 0.0
    %1117 = vmatpush1.msra.mxu0 0.0
    %1118 = vmatprep.subr.mxu0 0.0
    %1119 = vmatpush1.msra.mxu0 0.0
    %1120 = vmatprep.subr.mxu0 0.0
    %1121 = vmatpush1.msra.mxu0 0.0
    %1122 = vmatprep.subr.mxu0 0.0
    %1123 = vmatpush1.msra.mxu0 0.0
    %1124 = vmatprep.subr.mxu0 0.0
    %1125 = vmatpush1.msra.mxu0 0.0
    %1126 = vmatprep.subr.mxu0 0.0
    %1127 = vmatpush1.msra.mxu0 0.0
    %1128 = vmatprep.subr.mxu0 0.0
    %1129 = vmatpush1.msra.mxu0 0.0
    %1130 = vmatprep.subr.mxu0 0.0
    %1131 = vmatpush1.msra.mxu0 0.0
    %1132 = vmatprep.subr.mxu0 0.0
    %1133 = vmatpush1.msra.mxu0 0.0
    %1134 = vmatprep.subr.mxu0 0.0
    %1135 = vmatpush1.msra.mxu0 0.0
    %1136 = vmatprep.subr.mxu0 0.0
    %1137 = vmatpush1.msra.mxu0 0.0
    %1138 = vmatprep.subr.mxu0 0.0
    %1139 = vmatpush1.msra.mxu0 0.0
    %1140 = vmatprep.subr.mxu0 0.0
    %1141 = vmatpush1.msra.mxu0 0.0
    %1142 = vmatprep.subr.mxu0 0.0
    %1143 = vmatpush1.msra.mxu0 0.0
    %1144 = vmatprep.subr.mxu0 0.0
    %1145 = vmatpush1.msra.mxu0 0.0
    %1146 = vmatprep.subr.mxu0 0.0
    %1147 = vmatpush1.msra.mxu0 0.0
    %1148 = vmatprep.subr.mxu0 0.0
    %1149 = vmatpush1.msra.mxu0 0.0
    %1150 = vmatprep.subr.mxu0 0.0
    %1151 = vmatpush1.msra.mxu0 0.0
    %1152 = vmatprep.subr.mxu0 0.0
    %1153 = vmatpush1.msra.mxu0 0.0
    %1154 = vmatprep.subr.mxu0 0.0
    %1155 = vmatpush1.msra.mxu0 0.0
    %1156 = vmatprep.subr.mxu0 0.0
    %1157 = vmatpush1.msra.mxu0 0.0
    %1158 = vmatprep.subr.mxu0 0.0
    %1159 = vmatpush1.msra.mxu0 0.0
    %1160 = vmatprep.subr.mxu0 0.0
    %1161 = vmatpush1.msra.mxu0 0.0
    %1162 = vmatprep.subr.mxu0 0.0
    %1163 = vmatpush1.msra.mxu0 0.0
    %1164 = vmatprep.subr.mxu0 0.0
    %1165 = vmatpush1.msra.mxu0 0.0
    %1166 = vmatprep.subr.mxu0 0.0
    %1167 = vmatpush1.msra.mxu0 0.0
    %1168 = vmatprep.subr.mxu0 0.0
    %1169 = vmatpush1.msra.mxu0 0.0
    %1170 = vmatprep.subr.mxu0 0.0
    %1171 = vmatpush1.msra.mxu0 0.0
    %1172 = vmatprep.subr.mxu0 0.0
    %1173 = vmatpush1.msra.mxu0 0.0
    %1174 = vmatprep.subr.mxu0 0.0
    %1175 = vmatpush1.msra.mxu0 0.0
    %1176 = vmatprep.subr.mxu0 0.0
    %1177 = vmatpush1.msra.mxu0 0.0
    %1178 = vmatprep.mubr.f32.mxu0 0.0
    %1179 = vmatmul.mubr.f32.gmra.mrb[0].mxu0 %v1112
    %v1180 = vpop.f32.mrb[0].mxu0
    %v1181 = vadd.f32 0.0, %v1180
    %v1182 = vpop.f32.mrb[0].mxu0
    %1183 = vdwg.mxu0
    %1184 = vrot.lane.b32.xlu0 %v186, 104
    %v1185 = vpop.permute.xlu0 %1184
    %1186 = vrot.lane.b32.xlu0 %v186, 72
    %v1187 = vpop.permute.xlu0 %1186
    %v1188 = vsel %vm198, %v1185, 0
    %v1190 = vsel %vm198, %v1187, 0
    %1192 = vmatprep.subr.mxu0 0.0
    %1193 = vmatpush1.xpose.msra.mxu0 %v1190
    %1194 = vmatprep.subr.mxu0 0.0
    %1195 = vmatpush1.xpose.msra.mxu0 0.0
    %1196 = vmatprep.subr.mxu0 0.0
    %1197 = vmatpush1.xpose.msra.mxu0 0.0
    %1198 = vmatprep.subr.mxu0 0.0
    %1199 = vmatpush1.xpose.msra.mxu0 0.0
    %1200 = vmatprep.subr.mxu0 0.0
    %1201 = vmatpush1.xpose.msra.mxu0 0.0
    %1202 = vmatprep.subr.mxu0 0.0
    %1203 = vmatpush1.xpose.msra.mxu0 0.0
    %1204 = vmatprep.subr.mxu0 0.0
    %1205 = vmatpush1.xpose.msra.mxu0 0.0
    %1206 = vmatprep.subr.mxu0 0.0
    %1207 = vmatpush1.xpose.msra.mxu0 0.0
    %1208 = vmatprep.subr.mxu0 0.0
    %1209 = vmatpush1.xpose.msra.mxu0 0.0
    %1210 = vmatprep.subr.mxu0 0.0
    %1211 = vmatpush1.xpose.msra.mxu0 0.0
    %1212 = vmatprep.subr.mxu0 0.0
    %1213 = vmatpush1.xpose.msra.mxu0 0.0
    %1214 = vmatprep.subr.mxu0 0.0
    %1215 = vmatpush1.xpose.msra.mxu0 0.0
    %1216 = vmatprep.subr.mxu0 0.0
    %1217 = vmatpush1.xpose.msra.mxu0 0.0
    %1218 = vmatprep.subr.mxu0 0.0
    %1219 = vmatpush1.xpose.msra.mxu0 0.0
    %1220 = vmatprep.subr.mxu0 0.0
    %1221 = vmatpush1.xpose.msra.mxu0 0.0
    %1222 = vmatprep.subr.mxu0 0.0
    %1223 = vmatpush1.xpose.msra.mxu0 0.0
    %1224 = vmatprep.subr.mxu0 0.0
    %1225 = vmatpush1.xpose.msra.mxu0 0.0
    %1226 = vmatprep.subr.mxu0 0.0
    %1227 = vmatpush1.xpose.msra.mxu0 0.0
    %1228 = vmatprep.subr.mxu0 0.0
    %1229 = vmatpush1.xpose.msra.mxu0 0.0
    %1230 = vmatprep.subr.mxu0 0.0
    %1231 = vmatpush1.xpose.msra.mxu0 0.0
    %1232 = vmatprep.subr.mxu0 0.0
    %1233 = vmatpush1.xpose.msra.mxu0 0.0
    %1234 = vmatprep.subr.mxu0 0.0
    %1235 = vmatpush1.xpose.msra.mxu0 0.0
    %1236 = vmatprep.subr.mxu0 0.0
    %1237 = vmatpush1.xpose.msra.mxu0 0.0
    %1238 = vmatprep.subr.mxu0 0.0
    %1239 = vmatpush1.xpose.msra.mxu0 0.0
    %1240 = vmatprep.subr.mxu0 0.0
    %1241 = vmatpush1.xpose.msra.mxu0 0.0
    %1242 = vmatprep.subr.mxu0 0.0
    %1243 = vmatpush1.xpose.msra.mxu0 0.0
    %1244 = vmatprep.subr.mxu0 0.0
    %1245 = vmatpush1.xpose.msra.mxu0 0.0
    %1246 = vmatprep.subr.mxu0 0.0
    %1247 = vmatpush1.xpose.msra.mxu0 0.0
    %1248 = vmatprep.subr.mxu0 0.0
    %1249 = vmatpush1.xpose.msra.mxu0 0.0
    %1250 = vmatprep.subr.mxu0 0.0
    %1251 = vmatpush1.xpose.msra.mxu0 0.0
    %1252 = vmatprep.subr.mxu0 0.0
    %1253 = vmatpush1.xpose.msra.mxu0 0.0
    %1254 = vmatprep.subr.mxu0 0.0
    %1255 = vmatpush1.xpose.msra.mxu0 0.0
    %1256 = vmatprep.mubr.f32.mxu0 0.0
    %1257 = vmatmul.mubr.f32.gmra.mrb[0].mxu0 %v1188
    %v1258 = vpop.f32.mrb[0].mxu0
    %v1259 = vadd.f32 %v194, %v1258
    %v1260 = vpop.f32.mrb[0].mxu0
    %1261 = vdwg.mxu0
    %1262 = vrot.lane.b32.xlu0 %v191, 104
    %v1263 = vpop.permute.xlu0 %1262
    %1264 = vrot.lane.b32.xlu0 %v191, 72
    %v1265 = vpop.permute.xlu0 %1264
    %v1266 = vsel %vm198, %v1263, 0
    %v1268 = vsel %vm198, %v1265, 0
    %1270 = vmatprep.subr.mxu0 0.0
    %1271 = vmatpush1.xpose.msra.mxu0 %v1268
    %1272 = vmatprep.subr.mxu0 0.0
    %1273 = vmatpush1.xpose.msra.mxu0 0.0
    %1274 = vmatprep.subr.mxu0 0.0
    %1275 = vmatpush1.xpose.msra.mxu0 0.0
    %1276 = vmatprep.subr.mxu0 0.0
    %1277 = vmatpush1.xpose.msra.mxu0 0.0
    %1278 = vmatprep.subr.mxu0 0.0
    %1279 = vmatpush1.xpose.msra.mxu0 0.0
    %1280 = vmatprep.subr.mxu0 0.0
    %1281 = vmatpush1.xpose.msra.mxu0 0.0
    %1282 = vmatprep.subr.mxu0 0.0
    %1283 = vmatpush1.xpose.msra.mxu0 0.0
    %1284 = vmatprep.subr.mxu0 0.0
    %1285 = vmatpush1.xpose.msra.mxu0 0.0
    %1286 = vmatprep.subr.mxu0 0.0
    %1287 = vmatpush1.xpose.msra.mxu0 0.0
    %1288 = vmatprep.subr.mxu0 0.0
    %1289 = vmatpush1.xpose.msra.mxu0 0.0
    %1290 = vmatprep.subr.mxu0 0.0
    %1291 = vmatpush1.xpose.msra.mxu0 0.0
    %1292 = vmatprep.subr.mxu0 0.0
    %1293 = vmatpush1.xpose.msra.mxu0 0.0
    %1294 = vmatprep.subr.mxu0 0.0
    %1295 = vmatpush1.xpose.msra.mxu0 0.0
    %1296 = vmatprep.subr.mxu0 0.0
    %1297 = vmatpush1.xpose.msra.mxu0 0.0
    %1298 = vmatprep.subr.mxu0 0.0
    %1299 = vmatpush1.xpose.msra.mxu0 0.0
    %1300 = vmatprep.subr.mxu0 0.0
    %1301 = vmatpush1.xpose.msra.mxu0 0.0
    %1302 = vmatprep.subr.mxu0 0.0
    %1303 = vmatpush1.xpose.msra.mxu0 0.0
    %1304 = vmatprep.subr.mxu0 0.0
    %1305 = vmatpush1.xpose.msra.mxu0 0.0
    %1306 = vmatprep.subr.mxu0 0.0
    %1307 = vmatpush1.xpose.msra.mxu0 0.0
    %1308 = vmatprep.subr.mxu0 0.0
    %1309 = vmatpush1.xpose.msra.mxu0 0.0
    %1310 = vmatprep.subr.mxu0 0.0
    %1311 = vmatpush1.xpose.msra.mxu0 0.0
    %1312 = vmatprep.subr.mxu0 0.0
    %1313 = vmatpush1.xpose.msra.mxu0 0.0
    %1314 = vmatprep.subr.mxu0 0.0
    %1315 = vmatpush1.xpose.msra.mxu0 0.0
    %1316 = vmatprep.subr.mxu0 0.0
    %1317 = vmatpush1.xpose.msra.mxu0 0.0
    %1318 = vmatprep.subr.mxu0 0.0
    %1319 = vmatpush1.xpose.msra.mxu0 0.0
    %1320 = vmatprep.subr.mxu0 0.0
    %1321 = vmatpush1.xpose.msra.mxu0 0.0
    %1322 = vmatprep.subr.mxu0 0.0
    %1323 = vmatpush1.xpose.msra.mxu0 0.0
    %1324 = vmatprep.subr.mxu0 0.0
    %1325 = vmatpush1.xpose.msra.mxu0 0.0
    %1326 = vmatprep.subr.mxu0 0.0
    %1327 = vmatpush1.xpose.msra.mxu0 0.0
    %1328 = vmatprep.subr.mxu0 0.0
    %1329 = vmatpush1.xpose.msra.mxu0 0.0
    %1330 = vmatprep.subr.mxu0 0.0
    %1331 = vmatpush1.xpose.msra.mxu0 0.0
    %1332 = vmatprep.subr.mxu0 0.0
    %1333 = vmatpush1.xpose.msra.mxu0 0.0
    %1334 = vmatprep.mubr.f32.mxu0 0.0
    %1335 = vmatmul.mubr.f32.gmra.mrb[0].mxu0 %v1266
    %v1336 = vpop.f32.mrb[0].mxu0
    %v1337 = vadd.f32 %v194, %v1336
    %v1338 = vpop.f32.mrb[0].mxu0
    %1339 = vdwg.mxu0
    %v1340 = vsel %vm198, %v1259, -inf
    %1341 = vmax.xlane.f32.xlu0 %v1340
    %v1342 = vpop.xlane.xlu0 %1341
    %v1343 = vsel %vm198, %v1337, -inf
    %1344 = vmax.xlane.f32.xlu0 %v1343
    %v1345 = vpop.xlane.xlu0 %1344
    %v1346 = vsub.f32 %v1259, %v1342
    %v1347 = vsub.f32 %v1337, %v1345
    %v1348 = vmul.f32 %v1346, 1.442695
    %v1349 = vpow.pop %v1348
    %v1350 = vmul.f32 %v1347, 1.442695
    %v1351 = vpow.pop %v1350
    %v1352 = vsel %vm198, %v1349, 0.0
    %1353 = vadd.xlane.f32.xlu0 %v1352
    %v1354 = vpop.xlane.xlu0 %1353
    %v1355 = vsel %vm198, %v1351, 0.0
    %1356 = vadd.xlane.f32.xlu0 %v1355
    %v1357 = vpop.xlane.xlu0 %1356
    %v1358 = vrcp.pop %v1354
    %v1359 = vrcp.pop %v1357
    %v1360 = vmul.f32 %v1349, %v1358
    %v1361 = vmul.f32 %v1351, %v1359
    %1362 = vrot.lane.b32.xlu0 %v186, 40
    %v1363 = vpop.permute.xlu0 %1362
    %v1366 = vsel %vm198, %v1360, 0
    %1368 = vmatprep.subr.mxu0 0.0
    %1369 = vmatpush1.msra.mxu0 %v1363
    %1370 = vmatprep.subr.mxu0 0.0
    %1371 = vmatpush1.msra.mxu0 0.0
    %1372 = vmatprep.subr.mxu0 0.0
    %1373 = vmatpush1.msra.mxu0 0.0
    %1374 = vmatprep.subr.mxu0 0.0
    %1375 = vmatpush1.msra.mxu0 0.0
    %1376 = vmatprep.subr.mxu0 0.0
    %1377 = vmatpush1.msra.mxu0 0.0
    %1378 = vmatprep.subr.mxu0 0.0
    %1379 = vmatpush1.msra.mxu0 0.0
    %1380 = vmatprep.subr.mxu0 0.0
    %1381 = vmatpush1.msra.mxu0 0.0
    %1382 = vmatprep.subr.mxu0 0.0
    %1383 = vmatpush1.msra.mxu0 0.0
    %1384 = vmatprep.subr.mxu0 0.0
    %1385 = vmatpush1.msra.mxu0 0.0
    %1386 = vmatprep.subr.mxu0 0.0
    %1387 = vmatpush1.msra.mxu0 0.0
    %1388 = vmatprep.subr.mxu0 0.0
    %1389 = vmatpush1.msra.mxu0 0.0
    %1390 = vmatprep.subr.mxu0 0.0
    %1391 = vmatpush1.msra.mxu0 0.0
    %1392 = vmatprep.subr.mxu0 0.0
    %1393 = vmatpush1.msra.mxu0 0.0
    %1394 = vmatprep.subr.mxu0 0.0
    %1395 = vmatpush1.msra.mxu0 0.0
    %1396 = vmatprep.subr.mxu0 0.0
    %1397 = vmatpush1.msra.mxu0 0.0
    %1398 = vmatprep.subr.mxu0 0.0
    %1399 = vmatpush1.msra.mxu0 0.0
    %1400 = vmatprep.subr.mxu0 0.0
    %1401 = vmatpush1.msra.mxu0 0.0
    %1402 = vmatprep.subr.mxu0 0.0
    %1403 = vmatpush1.msra.mxu0 0.0
    %1404 = vmatprep.subr.mxu0 0.0
    %1405 = vmatpush1.msra.mxu0 0.0
    %1406 = vmatprep.subr.mxu0 0.0
    %1407 = vmatpush1.msra.mxu0 0.0
    %1408 = vmatprep.subr.mxu0 0.0
    %1409 = vmatpush1.msra.mxu0 0.0
    %1410 = vmatprep.subr.mxu0 0.0
    %1411 = vmatpush1.msra.mxu0 0.0
    %1412 = vmatprep.subr.mxu0 0.0
    %1413 = vmatpush1.msra.mxu0 0.0
    %1414 = vmatprep.subr.mxu0 0.0
    %1415 = vmatpush1.msra.mxu0 0.0
    %1416 = vmatprep.subr.mxu0 0.0
    %1417 = vmatpush1.msra.mxu0 0.0
    %1418 = vmatprep.subr.mxu0 0.0
    %1419 = vmatpush1.msra.mxu0 0.0
    %1420 = vmatprep.subr.mxu0 0.0
    %1421 = vmatpush1.msra.mxu0 0.0
    %1422 = vmatprep.subr.mxu0 0.0
    %1423 = vmatpush1.msra.mxu0 0.0
    %1424 = vmatprep.subr.mxu0 0.0
    %1425 = vmatpush1.msra.mxu0 0.0
    %1426 = vmatprep.subr.mxu0 0.0
    %1427 = vmatpush1.msra.mxu0 0.0
    %1428 = vmatprep.subr.mxu0 0.0
    %1429 = vmatpush1.msra.mxu0 0.0
    %1430 = vmatprep.subr.mxu0 0.0
    %1431 = vmatpush1.msra.mxu0 0.0
    %1432 = vmatprep.mubr.f32.mxu0 0.0
    %1433 = vmatmul.mubr.f32.gmra.mrb[0].mxu0 %v1366
    %v1434 = vpop.f32.mrb[0].mxu0
    %v1435 = vadd.f32 0.0, %v1434
    %v1436 = vpop.f32.mrb[0].mxu0
    %1437 = vdwg.mxu0
    %1438 = vrot.lane.b32.xlu0 %v191, 40
    %v1439 = vpop.permute.xlu0 %1438
    %v1442 = vsel %vm198, %v1361, 0
    %1444 = vmatprep.subr.mxu0 0.0
    %1445 = vmatpush1.msra.mxu0 %v1439
    %1446 = vmatprep.subr.mxu0 0.0
    %1447 = vmatpush1.msra.mxu0 0.0
    %1448 = vmatprep.subr.mxu0 0.0
    %1449 = vmatpush1.msra.mxu0 0.0
    %1450 = vmatprep.subr.mxu0 0.0
    %1451 = vmatpush1.msra.mxu0 0.0
    %1452 = vmatprep.subr.mxu0 0.0
    %1453 = vmatpush1.msra.mxu0 0.0
    %1454 = vmatprep.subr.mxu0 0.0
    %1455 = vmatpush1.msra.mxu0 0.0
    %1456 = vmatprep.subr.mxu0 0.0
    %1457 = vmatpush1.msra.mxu0 0.0
    %1458 = vmatprep.subr.mxu0 0.0
    %1459 = vmatpush1.msra.mxu0 0.0
    %1460 = vmatprep.subr.mxu0 0.0
    %1461 = vmatpush1.msra.mxu0 0.0
    %1462 = vmatprep.subr.mxu0 0.0
    %1463 = vmatpush1.msra.mxu0 0.0
    %1464 = vmatprep.subr.mxu0 0.0
    %1465 = vmatpush1.msra.mxu0 0.0
    %1466 = vmatprep.subr.mxu0 0.0
    %1467 = vmatpush1.msra.mxu0 0.0
    %1468 = vmatprep.subr.mxu0 0.0
    %1469 = vmatpush1.msra.mxu0 0.0
    %1470 = vmatprep.subr.mxu0 0.0
    %1471 = vmatpush1.msra.mxu0 0.0
    %1472 = vmatprep.subr.mxu0 0.0
    %1473 = vmatpush1.msra.mxu0 0.0
    %1474 = vmatprep.subr.mxu0 0.0
    %1475 = vmatpush1.msra.mxu0 0.0
    %1476 = vmatprep.subr.mxu0 0.0
    %1477 = vmatpush1.msra.mxu0 0.0
    %1478 = vmatprep.subr.mxu0 0.0
    %1479 = vmatpush1.msra.mxu0 0.0
    %1480 = vmatprep.subr.mxu0 0.0
    %1481 = vmatpush1.msra.mxu0 0.0
    %1482 = vmatprep.subr.mxu0 0.0
    %1483 = vmatpush1.msra.mxu0 0.0
    %1484 = vmatprep.subr.mxu0 0.0
    %1485 = vmatpush1.msra.mxu0 0.0
    %1486 = vmatprep.subr.mxu0 0.0
    %1487 = vmatpush1.msra.mxu0 0.0
    %1488 = vmatprep.subr.mxu0 0.0
    %1489 = vmatpush1.msra.mxu0 0.0
    %1490 = vmatprep.subr.mxu0 0.0
    %1491 = vmatpush1.msra.mxu0 0.0
    %1492 = vmatprep.subr.mxu0 0.0
    %1493 = vmatpush1.msra.mxu0 0.0
    %1494 = vmatprep.subr.mxu0 0.0
    %1495 = vmatpush1.msra.mxu0 0.0
    %1496 = vmatprep.subr.mxu0 0.0
    %1497 = vmatpush1.msra.mxu0 0.0
    %1498 = vmatprep.subr.mxu0 0.0
    %1499 = vmatpush1.msra.mxu0 0.0
    %1500 = vmatprep.subr.mxu0 0.0
    %1501 = vmatpush1.msra.mxu0 0.0
    %1502 = vmatprep.subr.mxu0 0.0
    %1503 = vmatpush1.msra.mxu0 0.0
    %1504 = vmatprep.subr.mxu0 0.0
    %1505 = vmatpush1.msra.mxu0 0.0
    %1506 = vmatprep.subr.mxu0 0.0
    %1507 = vmatpush1.msra.mxu0 0.0
    %1508 = vmatprep.mubr.f32.mxu0 0.0
    %1509 = vmatmul.mubr.f32.gmra.mrb[0].mxu0 %v1442
    %v1510 = vpop.f32.mrb[0].mxu0
    %v1511 = vadd.f32 0.0, %v1510
    %v1512 = vpop.f32.mrb[0].mxu0
    %1513 = vdwg.mxu0
    %1516 = vrot.lane.b32.xlu0 %v775, 8
    %v1517 = vpop.permute.xlu0 %1516
    %1518 = vrot.lane.b32.xlu0 %v851, 8
    %v1519 = vpop.permute.xlu0 %1518
    %1524 = vrot.lane.b32.xlu0 %v1105, 16
    %v1525 = vpop.permute.xlu0 %1524
    %1526 = vrot.lane.b32.xlu0 %v1181, 16
    %v1527 = vpop.permute.xlu0 %1526
    %1532 = vrot.lane.b32.xlu0 %v1435, 24
    %v1533 = vpop.permute.xlu0 %1532
    %1534 = vrot.lane.b32.xlu0 %v1511, 24
    %v1535 = vpop.permute.xlu0 %1534
    %v1538 = vsel %vm198, %v445, %v1517
    %v1539 = vsel %vm198, %v521, %v1519
    %vm1540 = vcmask 130048
    %v1541 = vsel %vm1540, %v1538, %v1525
    %v1542 = vsel %vm1540, %v1539, %v1527
    %vm1543 = vcmask 195584
    %v1544 = vsel %vm1543, %v1541, %v1533
    %v1545 = vsel %vm1543, %v1542, %v1535
    %v1546 = vld [vmem:[%s6] sm:$0xff]
    %v1547 = vld [vmem:[%s6 + $0x8] sm:$0xff]
    %v1548 = vld [vmem:[%s6 + $0x10] sm:$0xff]
    %v1549 = vld [vmem:[%s6 + $0x18] sm:$0xff]
    %v1550 = vld [vmem:[%s7] sm:$0x1]
    %v1552 = vlaneseq
    %v1553 = vshrl.u32 %v1552, 7
    %v1554 = vsub.s32 0, %v1553
    %v1555 = vrot.slane %v1550, %v1554
    %v1558 = vsel %vm52, %v1544, 0
    %v1561 = vsel %vm52, %v1545, 0
    %1563 = vmatprep.subr.mxu0 0.0
    %1564 = vmatpush1.msra.mxu0 %v1546
    %1565 = vmatprep.subr.mxu0 0.0
    %1566 = vmatpush1.msra.mxu0 %v1547
    %1567 = vmatprep.subr.mxu0 0.0
    %1568 = vmatpush1.msra.mxu0 %v1548
    %1569 = vmatprep.subr.mxu0 0.0
    %1570 = vmatpush1.msra.mxu0 %v1549
    %1571 = vmatprep.subr.mxu0 0.0
    %1572 = vmatpush1.msra.mxu0 0.0
    %1573 = vmatprep.subr.mxu0 0.0
    %1574 = vmatpush1.msra.mxu0 0.0
    %1575 = vmatprep.subr.mxu0 0.0
    %1576 = vmatpush1.msra.mxu0 0.0
    %1577 = vmatprep.subr.mxu0 0.0
    %1578 = vmatpush1.msra.mxu0 0.0
    %1579 = vmatprep.subr.mxu0 0.0
    %1580 = vmatpush1.msra.mxu0 0.0
    %1581 = vmatprep.subr.mxu0 0.0
    %1582 = vmatpush1.msra.mxu0 0.0
    %1583 = vmatprep.subr.mxu0 0.0
    %1584 = vmatpush1.msra.mxu0 0.0
    %1585 = vmatprep.subr.mxu0 0.0
    %1586 = vmatpush1.msra.mxu0 0.0
    %1587 = vmatprep.subr.mxu0 0.0
    %1588 = vmatpush1.msra.mxu0 0.0
    %1589 = vmatprep.subr.mxu0 0.0
    %1590 = vmatpush1.msra.mxu0 0.0
    %1591 = vmatprep.subr.mxu0 0.0
    %1592 = vmatpush1.msra.mxu0 0.0
    %1593 = vmatprep.subr.mxu0 0.0
    %1594 = vmatpush1.msra.mxu0 0.0
    %1595 = vmatprep.subr.mxu0 0.0
    %1596 = vmatpush1.msra.mxu0 0.0
    %1597 = vmatprep.subr.mxu0 0.0
    %1598 = vmatpush1.msra.mxu0 0.0
    %1599 = vmatprep.subr.mxu0 0.0
    %1600 = vmatpush1.msra.mxu0 0.0
    %1601 = vmatprep.subr.mxu0 0.0
    %1602 = vmatpush1.msra.mxu0 0.0
    %1603 = vmatprep.subr.mxu0 0.0
    %1604 = vmatpush1.msra.mxu0 0.0
    %1605 = vmatprep.subr.mxu0 0.0
    %1606 = vmatpush1.msra.mxu0 0.0
    %1607 = vmatprep.subr.mxu0 0.0
    %1608 = vmatpush1.msra.mxu0 0.0
    %1609 = vmatprep.subr.mxu0 0.0
    %1610 = vmatpush1.msra.mxu0 0.0
    %1611 = vmatprep.subr.mxu0 0.0
    %1612 = vmatpush1.msra.mxu0 0.0
    %1613 = vmatprep.subr.mxu0 0.0
    %1614 = vmatpush1.msra.mxu0 0.0
    %1615 = vmatprep.subr.mxu0 0.0
    %1616 = vmatpush1.msra.mxu0 0.0
    %1617 = vmatprep.subr.mxu0 0.0
    %1618 = vmatpush1.msra.mxu0 0.0
    %1619 = vmatprep.subr.mxu0 0.0
    %1620 = vmatpush1.msra.mxu0 0.0
    %1621 = vmatprep.subr.mxu0 0.0
    %1622 = vmatpush1.msra.mxu0 0.0
    %1623 = vmatprep.subr.mxu0 0.0
    %1624 = vmatpush1.msra.mxu0 0.0
    %1625 = vmatprep.subr.mxu0 0.0
    %1626 = vmatpush1.msra.mxu0 0.0
    %1627 = vmatprep.mubr.f32.mxu0 0.0
    %1628 = vmatmul.mubr.f32.gmra.mrb[0].mxu0 %v1558
    %v1629 = vpop.f32.mrb[0].mxu0
    %v1630 = vadd.f32 %v1555, %v1629
    %v1631 = vpop.f32.mrb[0].mxu0
    %1632 = vmatprep.mubr.f32.mxu0 0.0
    %1633 = vmatmul.mubr.f32.gmra.mrb[0].mxu0 %v1561
    %v1634 = vpop.f32.mrb[0].mxu0
    %v1635 = vadd.f32 %v1555, %v1634
    %v1636 = vpop.f32.mrb[0].mxu0
    %1637 = vdwg.mxu0
    %v1638 = vadd.f32 %v1630, %v48
    %v1639 = vadd.f32 %v1635, %v49
    %v1640 = vld [vmem:[%s8] sm:$0x1]
    %v1641 = vld [vmem:[%s9] sm:$0x1]
    %v1642 = vsel %vm52, %v1638, 0.0
    %1643 = vadd.xlane.f32.xlu0 %v1642
    %v1644 = vpop.xlane.xlu0 %1643
    %v1645 = vsel %vm52, %v1639, 0.0
    %1646 = vadd.xlane.f32.xlu0 %v1645
    %v1647 = vpop.xlane.xlu0 %1646
    %v1648 = vmul.f32 %v1644, %v59
    %v1649 = vmul.f32 %v1647, %v59
    %v1650 = vmul.f32 %v1638, %v1638
    %v1651 = vmul.f32 %v1639, %v1639
    %v1652 = vsel %vm52, %v1650, 0.0
    %1653 = vadd.xlane.f32.xlu0 %v1652
    %v1654 = vpop.xlane.xlu0 %1653
    %v1655 = vsel %vm52, %v1651, 0.0
    %1656 = vadd.xlane.f32.xlu0 %v1655
    %v1657 = vpop.xlane.xlu0 %1656
    %v1658 = vmul.f32 %v1654, %v59
    %v1659 = vmul.f32 %v1657, %v59
    %v1660 = vmul.f32 %v1648, %v1648
    %v1661 = vmul.f32 %v1649, %v1649
    %v1662 = vsub.f32 %v1658, %v1660
    %v1663 = vsub.f32 %v1659, %v1661
    %v1664 = vmax.f32 %v1662, 0.0
    %v1665 = vmax.f32 %v1663, 0.0
    %v1666 = vsub.f32 %v1638, %v1648
    %v1667 = vsub.f32 %v1639, %v1649
    %v1668 = vadd.f32 %v1664, 1e-05
    %v1669 = vadd.f32 %v1665, 1e-05
    %v1670 = vrsqrt.pop %v1668
    %v1671 = vrsqrt.pop %v1669
    %v1672 = vmul.f32 %v1666, %v1670
    %v1673 = vmul.f32 %v1667, %v1671
    %v1675 = vlaneseq
    %v1676 = vshrl.u32 %v1675, 7
    %v1677 = vsub.s32 0, %v1676
    %v1678 = vrot.slane %v1640, %v1677
    %v1680 = vmul.f32 %v1672, %v1678
    %v1681 = vmul.f32 %v1673, %v1678
    %v1683 = vlaneseq
    %v1684 = vshrl.u32 %v1683, 7
    %v1685 = vsub.s32 0, %v1684
    %v1686 = vrot.slane %v1641, %v1685
    %v1688 = vadd.f32 %v1680, %v1686
    %v1689 = vadd.f32 %v1681, %v1686
    %v1690 = vld [vmem:[%s10] sm:$0xff]
    %v1691 = vld [vmem:[%s10 + $0x8] sm:$0xff]
    %v1692 = vld [vmem:[%s10 + $0x10] sm:$0xff]
    %v1693 = vld [vmem:[%s10 + $0x18] sm:$0xff]
    %v1694 = vld [vmem:[%s11] sm:$0x1]
    %v1696 = vlaneseq
    %v1697 = vshrl.u32 %v1696, 7
    %v1698 = vsub.s32 0, %v1697
    %v1699 = vrot.slane %v1694, %v1698
    %v1702 = vsel %vm52, %v1688, 0
    %v1705 = vsel %vm52, %v1689, 0
    %1707 = vmatprep.subr.mxu0 0.0
    %1708 = vmatpush1.msra.mxu0 %v1690
    %1709 = vmatprep.subr.mxu0 0.0
    %1710 = vmatpush1.msra.mxu0 %v1691
    %1711 = vmatprep.subr.mxu0 0.0
    %1712 = vmatpush1.msra.mxu0 %v1692
    %1713 = vmatprep.subr.mxu0 0.0
    %1714 = vmatpush1.msra.mxu0 %v1693
    %1715 = vmatprep.subr.mxu0 0.0
    %1716 = vmatpush1.msra.mxu0 0.0
    %1717 = vmatprep.subr.mxu0 0.0
    %1718 = vmatpush1.msra.mxu0 0.0
    %1719 = vmatprep.subr.mxu0 0.0
    %1720 = vmatpush1.msra.mxu0 0.0
    %1721 = vmatprep.subr.mxu0 0.0
    %1722 = vmatpush1.msra.mxu0 0.0
    %1723 = vmatprep.subr.mxu0 0.0
    %1724 = vmatpush1.msra.mxu0 0.0
    %1725 = vmatprep.subr.mxu0 0.0
    %1726 = vmatpush1.msra.mxu0 0.0
    %1727 = vmatprep.subr.mxu0 0.0
    %1728 = vmatpush1.msra.mxu0 0.0
    %1729 = vmatprep.subr.mxu0 0.0
    %1730 = vmatpush1.msra.mxu0 0.0
    %1731 = vmatprep.subr.mxu0 0.0
    %1732 = vmatpush1.msra.mxu0 0.0
    %1733 = vmatprep.subr.mxu0 0.0
    %1734 = vmatpush1.msra.mxu0 0.0
    %1735 = vmatprep.subr.mxu0 0.0
    %1736 = vmatpush1.msra.mxu0 0.0
    %1737 = vmatprep.subr.mxu0 0.0
    %1738 = vmatpush1.msra.mxu0 0.0
    %1739 = vmatprep.subr.mxu0 0.0
    %1740 = vmatpush1.msra.mxu0 0.0
    %1741 = vmatprep.subr.mxu0 0.0
    %1742 = vmatpush1.msra.mxu0 0.0
    %1743 = vmatprep.subr.mxu0 0.0
    %1744 = vmatpush1.msra.mxu0 0.0
    %1745 = vmatprep.subr.mxu0 0.0
    %1746 = vmatpush1.msra.mxu0 0.0
    %1747 = vmatprep.subr.mxu0 0.0
    %1748 = vmatpush1.msra.mxu0 0.0
    %1749 = vmatprep.subr.mxu0 0.0
    %1750 = vmatpush1.msra.mxu0 0.0
    %1751 = vmatprep.subr.mxu0 0.0
    %1752 = vmatpush1.msra.mxu0 0.0
    %1753 = vmatprep.subr.mxu0 0.0
    %1754 = vmatpush1.msra.mxu0 0.0
    %1755 = vmatprep.subr.mxu0 0.0
    %1756 = vmatpush1.msra.mxu0 0.0
    %1757 = vmatprep.subr.mxu0 0.0
    %1758 = vmatpush1.msra.mxu0 0.0
    %1759 = vmatprep.subr.mxu0 0.0
    %1760 = vmatpush1.msra.mxu0 0.0
    %1761 = vmatprep.subr.mxu0 0.0
    %1762 = vmatpush1.msra.mxu0 0.0
    %1763 = vmatprep.subr.mxu0 0.0
    %1764 = vmatpush1.msra.mxu0 0.0
    %1765 = vmatprep.subr.mxu0 0.0
    %1766 = vmatpush1.msra.mxu0 0.0
    %1767 = vmatprep.subr.mxu0 0.0
    %1768 = vmatpush1.msra.mxu0 0.0
    %1769 = vmatprep.subr.mxu0 0.0
    %1770 = vmatpush1.msra.mxu0 0.0
    %1771 = vmatprep.mubr.f32.mxu0 0.0
    %1772 = vmatmul.mubr.f32.gmra.mrb[0].mxu0 %v1702
    %v1773 = vpop.f32.mrb[0].mxu0
    %v1774 = vadd.f32 %v1699, %v1773
    %v1775 = vpop.f32.mrb[0].mxu0
    %1776 = vmatprep.mubr.f32.mxu0 0.0
    %1777 = vmatmul.mubr.f32.gmra.mrb[0].mxu0 %v1705
    %v1778 = vpop.f32.mrb[0].mxu0
    %v1779 = vadd.f32 %v1699, %v1778
    %v1780 = vpop.f32.mrb[0].mxu0
    %1781 = vdwg.mxu0
    %vm1782 = vcmp.ge.f32.partialorder %v1774, 0.0
    %vm1783 = vcmp.ge.f32.partialorder %v1779, 0.0
    %v1784 = vmul.f32 %v1774, 0.01
    %v1785 = vmul.f32 %v1779, 0.01
    %v1786 = vsel %vm1782, %v1774, %v1784
    %v1787 = vsel %vm1783, %v1779, %v1785
    %v1788 = vld [vmem:[%s12] sm:$0xff]
    %v1789 = vld [vmem:[%s12 + $0x8] sm:$0xff]
    %v1790 = vld [vmem:[%s12 + $0x10] sm:$0xff]
    %v1791 = vld [vmem:[%s12 + $0x18] sm:$0xff]
    %v1792 = vld [vmem:[%s12 + $0x20] sm:$0xff]
    %v1793 = vld [vmem:[%s12 + $0x28] sm:$0xff]
    %v1794 = vld [vmem:[%s12 + $0x30] sm:$0xff]
    %v1795 = vld [vmem:[%s12 + $0x38] sm:$0xff]
    %v1796 = vld [vmem:[%s12 + $0x40] sm:$0xff]
    %v1797 = vld [vmem:[%s12 + $0x48] sm:$0xff]
    %v1798 = vld [vmem:[%s12 + $0x50] sm:$0xff]
    %v1799 = vld [vmem:[%s12 + $0x58] sm:$0xff]
    %v1800 = vld [vmem:[%s12 + $0x60] sm:$0xff]
    %v1801 = vld [vmem:[%s12 + $0x68] sm:$0xff]
    %v1802 = vld [vmem:[%s12 + $0x70] sm:$0xff]
    %v1803 = vld [vmem:[%s12 + $0x78] sm:$0xff]
    %v1804 = vld [vmem:[%s13] sm:$0x1]
    %v1806 = vlaneseq
    %v1807 = vshrl.u32 %v1806, 7
    %v1808 = vsub.s32 0, %v1807
    %v1809 = vrot.slane %v1804, %v1808
    %1811 = vmatprep.subr.mxu0 0.0
    %1812 = vmatpush1.msra.mxu0 %v1788
    %1813 = vmatprep.subr.mxu0 0.0
    %1814 = vmatpush1.msra.mxu0 %v1789
    %1815 = vmatprep.subr.mxu0 0.0
    %1816 = vmatpush1.msra.mxu0 %v1790
    %1817 = vmatprep.subr.mxu0 0.0
    %1818 = vmatpush1.msra.mxu0 %v1791
    %1819 = vmatprep.subr.mxu0 0.0
    %1820 = vmatpush1.msra.mxu0 %v1792
    %1821 = vmatprep.subr.mxu0 0.0
    %1822 = vmatpush1.msra.mxu0 %v1793
    %1823 = vmatprep.subr.mxu0 0.0
    %1824 = vmatpush1.msra.mxu0 %v1794
    %1825 = vmatprep.subr.mxu0 0.0
    %1826 = vmatpush1.msra.mxu0 %v1795
    %1827 = vmatprep.subr.mxu0 0.0
    %1828 = vmatpush1.msra.mxu0 %v1796
    %1829 = vmatprep.subr.mxu0 0.0
    %1830 = vmatpush1.msra.mxu0 %v1797
    %1831 = vmatprep.subr.mxu0 0.0
    %1832 = vmatpush1.msra.mxu0 %v1798
    %1833 = vmatprep.subr.mxu0 0.0
    %1834 = vmatpush1.msra.mxu0 %v1799
    %1835 = vmatprep.subr.mxu0 0.0
    %1836 = vmatpush1.msra.mxu0 %v1800
    %1837 = vmatprep.subr.mxu0 0.0
    %1838 = vmatpush1.msra.mxu0 %v1801
    %1839 = vmatprep.subr.mxu0 0.0
    %1840 = vmatpush1.msra.mxu0 %v1802
    %1841 = vmatprep.subr.mxu0 0.0
    %1842 = vmatpush1.msra.mxu0 %v1803
    %1843 = vmatprep.subr.mxu0 0.0
    %1844 = vmatpush1.msra.mxu0 0.0
    %1845 = vmatprep.subr.mxu0 0.0
    %1846 = vmatpush1.msra.mxu0 0.0
    %1847 = vmatprep.subr.mxu0 0.0
    %1848 = vmatpush1.msra.mxu0 0.0
    %1849 = vmatprep.subr.mxu0 0.0
    %1850 = vmatpush1.msra.mxu0 0.0
    %1851 = vmatprep.subr.mxu0 0.0
    %1852 = vmatpush1.msra.mxu0 0.0
    %1853 = vmatprep.subr.mxu0 0.0
    %1854 = vmatpush1.msra.mxu0 0.0
    %1855 = vmatprep.subr.mxu0 0.0
    %1856 = vmatpush1.msra.mxu0 0.0
    %1857 = vmatprep.subr.mxu0 0.0
    %1858 = vmatpush1.msra.mxu0 0.0
    %1859 = vmatprep.subr.mxu0 0.0
    %1860 = vmatpush1.msra.mxu0 0.0
    %1861 = vmatprep.subr.mxu0 0.0
    %1862 = vmatpush1.msra.mxu0 0.0
    %1863 = vmatprep.subr.mxu0 0.0
    %1864 = vmatpush1.msra.mxu0 0.0
    %1865 = vmatprep.subr.mxu0 0.0
    %1866 = vmatpush1.msra.mxu0 0.0
    %1867 = vmatprep.subr.mxu0 0.0
    %1868 = vmatpush1.msra.mxu0 0.0
    %1869 = vmatprep.subr.mxu0 0.0
    %1870 = vmatpush1.msra.mxu0 0.0
    %1871 = vmatprep.subr.mxu0 0.0
    %1872 = vmatpush1.msra.mxu0 0.0
    %1873 = vmatprep.subr.mxu0 0.0
    %1874 = vmatpush1.msra.mxu0 0.0
    %1875 = vmatprep.mubr.f32.mxu0 0.0
    %1876 = vmatmul.mubr.f32.gmra.mrb[0].mxu0 %v1786
    %v1877 = vpop.f32.mrb[0].mxu0
    %v1878 = vadd.f32 %v1809, %v1877
    %v1879 = vpop.f32.mrb[0].mxu0
    %1880 = vmatprep.mubr.f32.mxu0 0.0
    %1881 = vmatmul.mubr.f32.gmra.mrb[0].mxu0 %v1787
    %v1882 = vpop.f32.mrb[0].mxu0
    %v1883 = vadd.f32 %v1809, %v1882
    %v1884 = vpop.f32.mrb[0].mxu0
    %1885 = vdwg.mxu0
    %v1886 = vadd.f32 %v1878, %v1688
    %v1887 = vadd.f32 %v1883, %v1689
    %1888 = vst.msk [vmem:[#allocation2] sm:$0xff] %vm52, %v1886
    %1889 = vst.msk [vmem:[#allocation2 + $0x8] sm:$0xff] %vm52, %v1887
    // Predicated region
    $region58: #{tpu_custom_call.1} parent=1 // pred_check
      _
    $region59: #{tpu_custom_call.1} parent=1 // pred_check_branch
      %1891 = sbr.rel (0) target = $region61
    $region60: #{tpu_custom_call.1} parent=1 // pred_region
      %s1893 = ssub.s32 256, 256
      %1894 = vsyncadd [#allocation3], %s1893
      %s1895 = sshll.u32 [#allocation2], 4
      %s1896 = int_to_ptr.vmem [resolvable:$true] %s1895
      %1901 = dma.vmem_to_hbm [thread:$0]  %s1896, 256, %s14, [#allocation3], 128, 128, 8
    $region61: #{tpu_custom_call.1} parent=1 // pred_fallthru
      _
    // Predicated region
    $region62: #{tpu_custom_call.1} parent=1 // pred_check
      _
    $region63: #{tpu_custom_call.1} parent=1 // pred_check_branch
      %1903 = sbr.rel (0) target = $region65
    $region64: #{tpu_custom_call.1} parent=1 // pred_region
      %1904 = dma.done [#allocation3], 256
    $region65: #{tpu_custom_call.1} parent=1 // pred_fallthru
      _
    %1905 = vsyncpa [#allocation3], 1

</llo_original>
